<compile_context>
chip_gen: v7x
topology: tpu7x:2x2x1
jax: 0.10.0
libtpu: 0.0.40
codegen_flags: <defaults>
</compile_context>

<pallas_src>
import jax
import jax.numpy as jnp
from jax.experimental import pallas as pl
from jax.experimental.pallas import tpu as pltpu


def _round_up(v, m):
    return (v + m - 1) // m * m


def _probe_buffered():
    """One-time feature probe for BlockSpec(pipeline_mode=pl.Buffered(k))."""
    try:
        pl.BlockSpec((8, 128), lambda i: (0, 0), pipeline_mode=pl.Buffered(1))
        return True
    except (AttributeError, TypeError):
        return False


_HAS_BUFFERED = _probe_buffered()


def _device_info():
    """Per-generation VMEM budget and TensorCore count."""
    try:
        kind = jax.devices()[0].device_kind.lower()
    except Exception:
        kind = ""
    if "v7" in kind:
        # 64 MiB physical VMEM per TC, 2 TCs per chip.
        return {"num_cores": 2, "vmem_budget": 40 << 20, "vmem_cap": 56 << 20}
    # v5e / v6e: 128 MiB VMEM, 1 TC. (v4 / v5p megacore handled conservatively.)
    num_cores = 2 if ("v4" in kind or "v5p" in kind) else 1
    return {"num_cores": num_cores, "vmem_budget": 80 << 20, "vmem_cap": 100 << 20}


def _make_kernel(ratio):
    def kernel(x_ref, w1_ref, b1_ref, w2_ref, b2_ref, o_ref):
        # x_ref:  (tm, c)    streamed row tile
        # w1_ref: (c, h)     resident weight
        # b1_ref: (1, h)     resident bias
        # w2_ref: (h, c)     resident weight
        # b2_ref: (1, c)     resident bias
        # o_ref:  (tm, c)
        x = x_ref[...]
        h = jnp.dot(x, w1_ref[...], preferred_element_type=jnp.float32)
        h = jnp.maximum(h + b1_ref[...].astype(jnp.float32), 0.0)      # ReLU
        y = jnp.dot(h.astype(w2_ref.dtype), w2_ref[...],
                    preferred_element_type=jnp.float32)
        y = jnp.maximum(y + b2_ref[...].astype(jnp.float32), 0.0)      # ReLU
        if ratio is not None:
            # Fused CLIP-Adapter residual blend (x tile already in VMEM).
            y = ratio * y + (1.0 - ratio) * x.astype(jnp.float32)
        o_ref[...] = y.astype(o_ref.dtype)
    return kernel


def _build_call(n, c, h, tm, out_dtype, ratio, x_buffers, vmem_limit_bytes):
    grid = (pl.cdiv(n, tm),)

    def resident_spec(shape):
        # Grid-invariant operands: single-buffer to reclaim VMEM for row tiles.
        if _HAS_BUFFERED:
            return pl.BlockSpec(shape, lambda i: (0, 0),
                                pipeline_mode=pl.Buffered(1))
        return pl.BlockSpec(shape, lambda i: (0, 0))

    if _HAS_BUFFERED and x_buffers != 2:
        x_spec = pl.BlockSpec((tm, c), lambda i: (i, 0),
                              pipeline_mode=pl.Buffered(x_buffers))
    else:
        x_spec = pl.BlockSpec((tm, c), lambda i: (i, 0))

    return pl.pallas_call(
        _make_kernel(ratio),
        out_shape=jax.ShapeDtypeStruct((n, c), out_dtype),
        grid_spec=pltpu.PrefetchScalarGridSpec(
            num_scalar_prefetch=0,
            grid=grid,
            in_specs=[
                x_spec,                    # x rows (streamed)
                resident_spec((c, h)),     # W1
                resident_spec((1, h)),     # b1
                resident_spec((h, c)),     # W2
                resident_spec((1, c)),     # b2
            ],
            out_specs=pl.BlockSpec((tm, c), lambda i: (i, 0)),
        ),
        compiler_params=pltpu.CompilerParams(
            dimension_semantics=("parallel",),
            vmem_limit_bytes=vmem_limit_bytes,
        ),
    )


def adapter_forward(x, w1, b1, w2, b2, *, ratio=None, tm=1024, x_buffers=2,
                    compute_dtype=None, vmem_limit_bytes=None):
    """Pallas forward of the CLIP Adapter MLP: ReLU(ReLU(x@W1+b1)@W2+b2).

    x: (N, c_in) -> (N, c_in). Weights stored (in, out); biases (h,)/(c,) or
    (1, h)/(1, c). If `ratio` is a Python float, the CLIP-Adapter residual
    blend ratio*adapter(x) + (1-ratio)*x is fused into the kernel epilogue.
    `compute_dtype=jnp.bfloat16` enables the half-bandwidth MXU-native path.
    """
    if b1.ndim == 1:
        b1 = b1[None, :]
    if b2.ndim == 1:
        b2 = b2[None, :]

    n, c = x.shape
    hidden = w1.shape[1]

    # Consistent operand dtype for both MXU passes (f32 accumulation kept via
    # preferred_element_type inside the kernel).
    cdt = jnp.dtype(compute_dtype) if compute_dtype is not None else x.dtype
    x = x.astype(cdt)
    w1 = w1.astype(cdt)
    b1 = b1.astype(cdt)
    w2 = w2.astype(cdt)
    b2 = b2.astype(cdt)

    # Pad only the tiny hidden dimension of the weights/biases (one-time,
    # exact with zeros through linear+ReLU). x / out keep their native c:
    # full-dim blocks give masked tail stores for a non-128-multiple c, so no
    # extra HBM pad/slice pass over the (N, c) arrays.
    h_pad = _round_up(hidden, 128)
    if h_pad != hidden:
        w1 = jnp.pad(w1, ((0, 0), (0, h_pad - hidden)))
        b1 = jnp.pad(b1, ((0, 0), (0, h_pad - hidden)))
        w2 = jnp.pad(w2, ((0, h_pad - hidden), (0, 0)))

    info = _device_info()
    itemsize = jnp.dtype(cdt).itemsize
    sublane = 16 if itemsize <= 2 else 8

    # VMEM accounting: resident weights/biases + streamed x/out buffers.
    resident = (2 * c * h_pad + h_pad + c) * itemsize
    if not _HAS_BUFFERED:
        resident *= 2                       # weights fall back to double buffering
    stream_bufs = x_buffers + 2             # x buffers + double-buffered out

    # Largest row tile fitting the per-generation VMEM budget.
    per_row = stream_bufs * c * itemsize
    tm_fit = max(sublane, (info["vmem_budget"] - resident) // per_row)
    tm = min(tm, tm_fit)
    # Give every TensorCore at least 2 pipelined grid steps (v7x megacore).
    min_steps = 2 * info["num_cores"]
    tm = min(tm, max(sublane, -(-n // min_steps)))
    tm = _round_up(max(sublane, min(tm, n)), sublane)

    if vmem_limit_bytes is None:
        need = resident + stream_bufs * tm * c * itemsize
        vmem_limit_bytes = int(min(info["vmem_cap"],
                                   max(32 << 20, need + (4 << 20))))

    call = _build_call(n, c, h_pad, tm, cdt, ratio, x_buffers, vmem_limit_bytes)
    return call(x, w1, b1, w2, b2)


def init_adapter_params(key, c_in, reduction=4, dtype=jnp.float32):
    """Deterministic synthetic init (PyTorch-style uniform bounds), (in, out)."""
    hidden = c_in // reduction
    k1, k2, k3, k4 = jax.random.split(key, 4)
    bound1 = 1.0 / jnp.sqrt(jnp.asarray(c_in, dtype))
    bound2 = 1.0 / jnp.sqrt(jnp.asarray(hidden, dtype))
    w1 = jax.random.uniform(k1, (c_in, hidden), dtype, -bound1, bound1)
    b1 = jax.random.uniform(k2, (1, hidden), dtype, -bound1, bound1)
    w2 = jax.random.uniform(k3, (hidden, c_in), dtype, -bound2, bound2)
    b2 = jax.random.uniform(k4, (1, c_in), dtype, -bound2, bound2)
    return w1, b1, w2, b2


def adapter_reference(x, w1, b1, w2, b2, ratio=None):
    if b1.ndim == 1:
        b1 = b1[None, :]
    if b2.ndim == 1:
        b2 = b2[None, :]
    hp = jax.lax.Precision.HIGHEST
    h = jnp.maximum(jnp.dot(x, w1, precision=hp,
                            preferred_element_type=jnp.float32)
                    + b1.astype(jnp.float32), 0.0)
    y = jnp.maximum(jnp.dot(h.astype(w2.dtype), w2, precision=hp,
                            preferred_element_type=jnp.float32)
                    + b2.astype(jnp.float32), 0.0)
    if ratio is not None:
        y = ratio * y + (1.0 - ratio) * x.astype(jnp.float32)
    return y.astype(x.dtype)


if __name__ == "__main__":
    key = jax.random.PRNGKey(0)

    # Case 1: lane-aligned f32 (realistic CLIP dims, scaled down). Default
    # tiling gives >=2 pipelined steps per TensorCore on every generation.
    k1, k2, key = jax.random.split(key, 3)
    n1, c1 = 512, 512                                   # hidden = 128
    x1 = jax.random.normal(k1, (n1, c1), jnp.float32)
    p1 = init_adapter_params(k2, c1, reduction=4)
    out1 = jax.block_until_ready(adapter_forward(x1, *p1))
    ref1 = adapter_reference(x1, *p1)
    assert out1.shape == (n1, c1)
    assert jnp.allclose(out1, ref1, atol=5e-3, rtol=5e-3), "mismatch (case 1)"

    # Case 2: non-lane-aligned feature/hidden dims -> no wrapper-side x padding,
    # only the hidden dim of the weights is padded (exact), masked tail stores.
    k3, k4, key = jax.random.split(key, 3)
    n2, c2 = 20, 96                                     # hidden = 24 -> 128
    x2 = jax.random.normal(k3, (n2, c2), jnp.float32)
    p2 = init_adapter_params(k4, c2, reduction=4)
    out2 = jax.block_until_ready(adapter_forward(x2, *p2))
    ref2 = adapter_reference(x2, *p2)
    assert out2.shape == (n2, c2)
    assert jnp.allclose(out2, ref2, atol=5e-3, rtol=5e-3), "mismatch (case 2)"

    # Case 3: bf16 operand path + fused CLIP-Adapter residual epilogue.
    k5, k6, key = jax.random.split(key, 3)
    n3, c3, ratio = 256, 512, 0.2
    x3 = jax.random.normal(k5, (n3, c3), jnp.float32)
    p3 = init_adapter_params(k6, c3, reduction=4)
    out3 = jax.block_until_ready(
        adapter_forward(x3, *p3, ratio=ratio, compute_dtype=jnp.bfloat16))
    ref3 = adapter_reference(x3.astype(jnp.bfloat16),
                             *[p.astype(jnp.bfloat16) for p in p3], ratio=ratio)
    assert out3.shape == (n3, c3) and out3.dtype == jnp.bfloat16
    assert jnp.allclose(out3.astype(jnp.float32), ref3.astype(jnp.float32),
                        atol=3e-2, rtol=3e-2), "mismatch (case 3)"

    print("KERNEL_OK")
</pallas_src>

<mosaic_0001>
module attributes {stable_mosaic.version = 11 : i64} {
  func.func @kernel(%arg0: i32, %arg1: memref<256x512xf32, #tpu.memory_space<vmem>>, %arg2: memref<512x128xf32, #tpu.memory_space<vmem>>, %arg3: memref<1x128xf32, #tpu.memory_space<vmem>>, %arg4: memref<128x512xf32, #tpu.memory_space<vmem>>, %arg5: memref<1x512xf32, #tpu.memory_space<vmem>>, %arg6: memref<256x512xf32, #tpu.memory_space<vmem>>) attributes {dimension_semantics = [#tpu.dimension_semantics<parallel>], iteration_bounds = array<i64: 2>, scalar_prefetch = 0 : i64, scratch_operands = 0 : i64, tpu.core_type = #tpu.core_type<tc>, window_params = [{transform_indices = @transform_0, window_bounds = array<i64: 256, 512>}, {pipeline_mode = #tpu.pipeline_mode<synchronous>, transform_indices = @transform_1, window_bounds = array<i64: 512, 128>}, {pipeline_mode = #tpu.pipeline_mode<synchronous>, transform_indices = @transform_2, window_bounds = array<i64: 1, 128>}, {pipeline_mode = #tpu.pipeline_mode<synchronous>, transform_indices = @transform_3, window_bounds = array<i64: 128, 512>}, {pipeline_mode = #tpu.pipeline_mode<synchronous>, transform_indices = @transform_4, window_bounds = array<i64: 1, 512>}, {transform_indices = @transform_5, window_bounds = array<i64: 256, 512>}]} {
    %c0 = arith.constant 0 : index
    %c0_0 = arith.constant 0 : index
    %0 = vector.load %arg1[%c0, %c0_0] : memref<256x512xf32, #tpu.memory_space<vmem>>, vector<256x512xf32>
    %c0_1 = arith.constant 0 : index
    %c0_2 = arith.constant 0 : index
    %1 = vector.load %arg2[%c0_1, %c0_2] : memref<512x128xf32, #tpu.memory_space<vmem>>, vector<512x128xf32>
    %cst = arith.constant dense<0.000000e+00> : vector<256x128xf32>
    %2 = tpu.matmul %0, %1, %cst {dimension_numbers = #tpu.dot_dimension_numbers<[1], [0], [0], [1], [0, 0, 1, 1], [], []>} : vector<256x512xf32>, vector<512x128xf32>, vector<256x128xf32> -> vector<256x128xf32>
    %c0_3 = arith.constant 0 : index
    %c0_4 = arith.constant 0 : index
    %3 = vector.load %arg3[%c0_3, %c0_4] : memref<1x128xf32, #tpu.memory_space<vmem>>, vector<1x128xf32>
    %4 = vector.broadcast %3 : vector<1x128xf32> to vector<256x128xf32>
    %5 = arith.addf %2, %4 : vector<256x128xf32>
    %cst_5 = arith.constant 0.000000e+00 : f32
    %6 = vector.broadcast %cst_5 : f32 to vector<256x128xf32>
    %7 = arith.maximumf %5, %6 : vector<256x128xf32>
    %c0_6 = arith.constant 0 : index
    %c0_7 = arith.constant 0 : index
    %8 = vector.load %arg4[%c0_6, %c0_7] : memref<128x512xf32, #tpu.memory_space<vmem>>, vector<128x512xf32>
    %cst_8 = arith.constant dense<0.000000e+00> : vector<256x512xf32>
    %9 = tpu.matmul %7, %8, %cst_8 {dimension_numbers = #tpu.dot_dimension_numbers<[1], [0], [0], [1], [0, 0, 1, 1], [], []>} : vector<256x128xf32>, vector<128x512xf32>, vector<256x512xf32> -> vector<256x512xf32>
    %c0_9 = arith.constant 0 : index
    %c0_10 = arith.constant 0 : index
    %10 = vector.load %arg5[%c0_9, %c0_10] : memref<1x512xf32, #tpu.memory_space<vmem>>, vector<1x512xf32>
    %11 = vector.broadcast %10 : vector<1x512xf32> to vector<256x512xf32>
    %12 = arith.addf %9, %11 : vector<256x512xf32>
    %cst_11 = arith.constant 0.000000e+00 : f32
    %13 = vector.broadcast %cst_11 : f32 to vector<256x512xf32>
    %14 = arith.maximumf %12, %13 : vector<256x512xf32>
    %c0_12 = arith.constant 0 : index
    %c0_13 = arith.constant 0 : index
    %15 = vector.load %arg6[%c0_12, %c0_13] : memref<256x512xf32, #tpu.memory_space<vmem>>, vector<256x512xf32>
    tpu.vector_store %arg6[%c0_12, %c0_13], %14 {strides = array<i32>} : memref<256x512xf32, #tpu.memory_space<vmem>>, vector<256x512xf32>,
    return
  }
  func.func @transform_0(%arg0: i32) -> (i32, i32) {
    %c0_i32 = arith.constant 0 : i32
    %c0_i32_0 = arith.constant 0 : i32
    return %arg0, %c0_i32 : i32, i32
  }
  func.func @transform_1(%arg0: i32) -> (i32, i32) {
    %c0_i32 = arith.constant 0 : i32
    %c0_i32_0 = arith.constant 0 : i32
    %c0_i32_1 = arith.constant 0 : i32
    return %c0_i32, %c0_i32_0 : i32, i32
  }
  func.func @transform_2(%arg0: i32) -> (i32, i32) {
    %c0_i32 = arith.constant 0 : i32
    %c0_i32_0 = arith.constant 0 : i32
    %c0_i32_1 = arith.constant 0 : i32
    return %c0_i32, %c0_i32_0 : i32, i32
  }
  func.func @transform_3(%arg0: i32) -> (i32, i32) {
    %c0_i32 = arith.constant 0 : i32
    %c0_i32_0 = arith.constant 0 : i32
    %c0_i32_1 = arith.constant 0 : i32
    return %c0_i32, %c0_i32_0 : i32, i32
  }
  func.func @transform_4(%arg0: i32) -> (i32, i32) {
    %c0_i32 = arith.constant 0 : i32
    %c0_i32_0 = arith.constant 0 : i32
    %c0_i32_1 = arith.constant 0 : i32
    return %c0_i32, %c0_i32_0 : i32, i32
  }
  func.func @transform_5(%arg0: i32) -> (i32, i32) {
    %c0_i32 = arith.constant 0 : i32
    %c0_i32_0 = arith.constant 0 : i32
    return %arg0, %c0_i32 : i32, i32
  }
}

</mosaic_0001>

<llo_original>
// kernel: tpu_custom_call.1
$region0: #{tpu_custom_call.1}
  #allocation0 [shape = 'u32[]', space=smem, size = 0x4, offset = 0x4, fixed_abs, tag = 'smem constant byte address 0x4 - core index']
  #allocation1 [shape = 'u32[144,128]{1,0:T(1,128)}', space=vmem, size = 0x12000, scoped, tag = 'internal scratch']
  %s0 = inlined_call_operand.hbm [shape: f32[512,512], index: 0, kind: input, shape index: {}]
  %s1 = inlined_call_operand.hbm [shape: f32[512,128], index: 1, kind: input, shape index: {}]
  %s2 = inlined_call_operand.vmem [shape: f32[1,128], index: 2, kind: input, shape index: {}]
  %s3 = inlined_call_operand.hbm [shape: f32[128,512], index: 3, kind: input, shape index: {}]
  %s4 = inlined_call_operand.vmem [shape: f32[1,512], index: 4, kind: input, shape index: {}]
  %s5 = inlined_call_operand.hbm [shape: f32[512,512], index: 5, kind: output, shape index: {}]
  %s6 = sld [smem:[#allocation0]]
  $region65: #{tpu_custom_call.1} parent=0
    _
  %s8 = ssub.s32 1, %s6
  %s9 = scalar_select 0, %s8, %s6
  $region1: #{tpu_custom_call.1} parent=0
    #allocation2 [shape = 'u8[1048576]{0}', space=vmem, size = 0x100000, scoped, tag = 'input window, operand 0']
    #allocation3 [shape = 's32[2]{0}', space=sflag, size = 0x8, scoped, tag = 'scoped memory for tpu_custom_call.1']
    #allocation4 [shape = 's32[2]{0}', space=sflag, size = 0x8, scoped, tag = 'scoped memory for tpu_custom_call.1']
    #allocation5 [shape = 'u8[262144]{0}', space=vmem, size = 0x40000, scoped, tag = 'input window, operand 1, single buffered']
    #allocation6 [shape = 's32[1]{0}', space=sflag, size = 0x4, scoped, tag = 'scoped memory for tpu_custom_call.1']
    #allocation7 [shape = 'u8[262144]{0}', space=vmem, size = 0x40000, scoped, tag = 'input window, operand 3, single buffered']
    #allocation8 [shape = 'u8[1048576]{0}', space=vmem, size = 0x100000, scoped, tag = 'output window, operand 0']
    %10 = vsyncpa [#allocation3], 0
    %s11 = scalar_lea.sflag [#allocation3], 1
    %12 = vsyncpa %s11, 0
    %13 = vsyncpa [#allocation6], 0
    %14 = vsyncpa [#allocation4], 0
    %s15 = scalar_lea.sflag [#allocation4], 1
    %16 = vsyncpa %s15, 0
    loop: start=0, step=1, limit=4
    $region2: #{tpu_custom_call.1} parent=1 // loop_pre_header
      _
    $region3: #{tpu_custom_call.1} parent=1 // loop_header
      %s18 = sphi 0, %s22
      %p19 = scmp.ge.s32.totalorder %s18, 4
      %s28 = sphi 0, %s30
      %s31 = sphi 0, %s28
      %s32 = sphi 0, %s31
      %s48 = sphi 0, %s32
      %s52 = sphi 0, %s52
      %s54 = sphi 0, %s52
      %s55 = sphi 0, %s54
      %s69 = sphi 0, %s55
      %s73 = sphi 0, %s73
      %s75 = sphi 0, %s73
      %s76 = sphi 0, %s75
      %s90 = sphi 0, %s76
      %s94 = sphi 0, %s94
      %s96 = sphi 0, %s94
      %s97 = sphi 0, %s96
      %s111 = sphi 0, %s97
      %s115 = sphi 0, %s115
      %s117 = sphi 0, %s115
      %s118 = sphi 0, %s117
      %s132 = sphi 0, %s118
      %s138 = sphi 0, %s140
      %s141 = sphi 0, %s138
      %s142 = sphi 0, %s141
      %s158 = sphi 0, %s142
    $region4: #{tpu_custom_call.1} parent=1 // loop_header_branch
      %21 = sbr.rel (%p19) target = $region8
    $region5: #{tpu_custom_call.1} parent=1 // loop_body
      %s23 = ssub.s32 %s18, 1
      %s24 = ssub.s32 %s18, 2
      %s25 = sadd.s32 %s18, 1
      %s26 = ssub.s32 %s18, %s25
      %p27 = scmp.eq.s32.totalorder %s26, 0
      %s29 = sadd.s32 %s28, 1
      %s30 = scalar_select %p27, %s28, %s29
      %p33 = pneg %p27
      %p34 = scmp.eq.s32.totalorder %s18, 1
      %p35 = por %p33, %p34
      %p36 = scmp.ne.s32.totalorder %s28, %s31
      %p37 = scmp.eq.s32.totalorder %s18, 0
      %p38 = por %p36, %p37
      %p39 = scmp.ne.s32.totalorder %s28, %s31
      %p40 = scmp.eq.s32.totalorder %s23, 1
      %p41 = por %p39, %p40
      %p42 = scmp.ne.s32.totalorder %s31, %s32
      %p43 = scmp.eq.s32.totalorder %s23, 0
      %p44 = por %p42, %p43
      %p45 = scmp.ne.s32.totalorder %s31, %s32
      %p46 = scmp.eq.s32.totalorder %s24, 1
      %p47 = por %p45, %p46
      %p49 = scmp.ne.s32.totalorder %s32, %s48
      %p50 = scmp.eq.s32.totalorder %s24, 0
      %p51 = por %p49, %p50
      %s53 = sadd.s32 %s52, 1
      %p56 = scmp.eq.s32.totalorder %s18, 1
      %p57 = scmp.ne.s32.totalorder %s52, %s54
      %p58 = scmp.eq.s32.totalorder %s18, 0
      %p59 = por %p57, %p58
      %p60 = scmp.ne.s32.totalorder %s52, %s54
      %p61 = scmp.eq.s32.totalorder %s23, 1
      %p62 = por %p60, %p61
      %p63 = scmp.ne.s32.totalorder %s54, %s55
      %p64 = scmp.eq.s32.totalorder %s23, 0
      %p65 = por %p63, %p64
      %p66 = scmp.ne.s32.totalorder %s54, %s55
      %p67 = scmp.eq.s32.totalorder %s24, 1
      %p68 = por %p66, %p67
      %p70 = scmp.ne.s32.totalorder %s55, %s69
      %p71 = scmp.eq.s32.totalorder %s24, 0
      %p72 = por %p70, %p71
      %s74 = sadd.s32 %s73, 1
      %p77 = scmp.eq.s32.totalorder %s18, 1
      %p78 = scmp.ne.s32.totalorder %s73, %s75
      %p79 = scmp.eq.s32.totalorder %s18, 0
      %p80 = por %p78, %p79
      %p81 = scmp.ne.s32.totalorder %s73, %s75
      %p82 = scmp.eq.s32.totalorder %s23, 1
      %p83 = por %p81, %p82
      %p84 = scmp.ne.s32.totalorder %s75, %s76
      %p85 = scmp.eq.s32.totalorder %s23, 0
      %p86 = por %p84, %p85
      %p87 = scmp.ne.s32.totalorder %s75, %s76
      %p88 = scmp.eq.s32.totalorder %s24, 1
      %p89 = por %p87, %p88
      %p91 = scmp.ne.s32.totalorder %s76, %s90
      %p92 = scmp.eq.s32.totalorder %s24, 0
      %p93 = por %p91, %p92
      %s95 = sadd.s32 %s94, 1
      %p98 = scmp.eq.s32.totalorder %s18, 1
      %p99 = scmp.ne.s32.totalorder %s94, %s96
      %p100 = scmp.eq.s32.totalorder %s18, 0
      %p101 = por %p99, %p100
      %p102 = scmp.ne.s32.totalorder %s94, %s96
      %p103 = scmp.eq.s32.totalorder %s23, 1
      %p104 = por %p102, %p103
      %p105 = scmp.ne.s32.totalorder %s96, %s97
      %p106 = scmp.eq.s32.totalorder %s23, 0
      %p107 = por %p105, %p106
      %p108 = scmp.ne.s32.totalorder %s96, %s97
      %p109 = scmp.eq.s32.totalorder %s24, 1
      %p110 = por %p108, %p109
      %p112 = scmp.ne.s32.totalorder %s97, %s111
      %p113 = scmp.eq.s32.totalorder %s24, 0
      %p114 = por %p112, %p113
      %s116 = sadd.s32 %s115, 1
      %p119 = scmp.eq.s32.totalorder %s18, 1
      %p120 = scmp.ne.s32.totalorder %s115, %s117
      %p121 = scmp.eq.s32.totalorder %s18, 0
      %p122 = por %p120, %p121
      %p123 = scmp.ne.s32.totalorder %s115, %s117
      %p124 = scmp.eq.s32.totalorder %s23, 1
      %p125 = por %p123, %p124
      %p126 = scmp.ne.s32.totalorder %s117, %s118
      %p127 = scmp.eq.s32.totalorder %s23, 0
      %p128 = por %p126, %p127
      %p129 = scmp.ne.s32.totalorder %s117, %s118
      %p130 = scmp.eq.s32.totalorder %s24, 1
      %p131 = por %p129, %p130
      %p133 = scmp.ne.s32.totalorder %s118, %s132
      %p134 = scmp.eq.s32.totalorder %s24, 0
      %p135 = por %p133, %p134
      %s136 = ssub.s32 %s18, %s25
      %p137 = scmp.eq.s32.totalorder %s136, 0
      %s139 = sadd.s32 %s138, 1
      %s140 = scalar_select %p137, %s138, %s139
      %p143 = pneg %p137
      %p144 = scmp.eq.s32.totalorder %s18, 1
      %p145 = por %p143, %p144
      %p146 = scmp.ne.s32.totalorder %s138, %s141
      %p147 = scmp.eq.s32.totalorder %s18, 0
      %p148 = por %p146, %p147
      %p149 = scmp.ne.s32.totalorder %s138, %s141
      %p150 = scmp.eq.s32.totalorder %s23, 1
      %p151 = por %p149, %p150
      %p152 = scmp.ne.s32.totalorder %s141, %s142
      %p153 = scmp.eq.s32.totalorder %s23, 0
      %p154 = por %p152, %p153
      %p155 = scmp.ne.s32.totalorder %s141, %s142
      %p156 = scmp.eq.s32.totalorder %s24, 1
      %p157 = por %p155, %p156
      %p159 = scmp.ne.s32.totalorder %s142, %s158
      %p160 = scmp.eq.s32.totalorder %s24, 0
      %p161 = por %p159, %p160
      %p162 = scmp.le.s32.totalorder 1, %s18
      %p163 = scmp.lt.s32.totalorder %s18, 3
      %p164 = pnand %p162, %p163
      %p165 = pneg %p164
      // Predicated region
      $region9: #{tpu_custom_call.1} parent=5 // pred_check
        _
      $region10: #{tpu_custom_call.1} parent=5 // pred_check_branch
        %167 = sbr.rel (%p164) target = $region12
      $region11: #{tpu_custom_call.1} parent=5 // pred_region
        %s168 = ssub.s32 %s18, 1
        // Predicated region
        $region13: #{tpu_custom_call.1} parent=11 // pred_check
          %p169 = pneg %p65
        $region14: #{tpu_custom_call.1} parent=11 // pred_check_branch
          %171 = sbr.rel (%p169) target = $region16
        $region15: #{tpu_custom_call.1} parent=11 // pred_region
          %s173 = ssub.s32 8192, 8192
          %174 = vsyncadd [#allocation6], %s173
          %s175 = sshll.u32 [#allocation5], 4
          %s176 = int_to_ptr.vmem [resolvable:$true] %s175
          %181 = dma.hbm_to_vmem [thread:$0]  %s1, 8192, %s176, [#allocation6], 128, 128, 8
        $region16: #{tpu_custom_call.1} parent=11 // pred_fallthru
          _
        // Predicated region
        $region17: #{tpu_custom_call.1} parent=11 // pred_check
          %p182 = pneg %p86
        $region18: #{tpu_custom_call.1} parent=11 // pred_check_branch
          %184 = sbr.rel (%p182) target = $region20
        $region19: #{tpu_custom_call.1} parent=11 // pred_region
          _
        $region20: #{tpu_custom_call.1} parent=11 // pred_fallthru
          _
        // Predicated region
        $region21: #{tpu_custom_call.1} parent=11 // pred_check
          %p185 = pneg %p107
        $region22: #{tpu_custom_call.1} parent=11 // pred_check_branch
          %187 = sbr.rel (%p185) target = $region24
        $region23: #{tpu_custom_call.1} parent=11 // pred_region
          %s189 = ssub.s32 8192, 8192
          %190 = vsyncadd [#allocation6], %s189
          %s191 = sshll.u32 [#allocation7], 4
          %s192 = int_to_ptr.vmem [resolvable:$true] %s191
          %197 = dma.hbm_to_vmem [thread:$0]  %s3, 8192, %s192, [#allocation6], 512, 512, 32
        $region24: #{tpu_custom_call.1} parent=11 // pred_fallthru
          _
        // Predicated region
        $region25: #{tpu_custom_call.1} parent=11 // pred_check
          %p198 = pneg %p128
        $region26: #{tpu_custom_call.1} parent=11 // pred_check_branch
          %200 = sbr.rel (%p198) target = $region28
        $region27: #{tpu_custom_call.1} parent=11 // pred_region
          _
        $region28: #{tpu_custom_call.1} parent=11 // pred_fallthru
          _
      $region12: #{tpu_custom_call.1} parent=5 // pred_fallthru
        _
      %p201 = scmp.lt.s32.totalorder %s18, 2
      // Predicated region
      $region29: #{tpu_custom_call.1} parent=5 // pred_check
        %p202 = pneg %p201
      $region30: #{tpu_custom_call.1} parent=5 // pred_check_branch
        %204 = sbr.rel (%p202) target = $region32
      $region31: #{tpu_custom_call.1} parent=5 // pred_region
        // Predicated region
        $region33: #{tpu_custom_call.1} parent=31 // pred_check
          %p205 = pneg %p38
        $region34: #{tpu_custom_call.1} parent=31 // pred_check_branch
          %207 = sbr.rel (%p205) target = $region36
        $region35: #{tpu_custom_call.1} parent=31 // pred_region
          %s208 = sand.u32 %s28, 1
          %s209 = scalar_lea.sflag [#allocation3], %s208
          %s210 = sand.u32 %s28, 1
          %s211 = smul.addr %s210, 1024
          %s212 = scalar_lea.vmem [#allocation2], %s211
          %s213 = smul.u32 32, %s18
          %s215 = ssub.s32 16384, 16384
          %216 = vsyncadd %s209, %s215
          %s217 = smul.addr %s213, 4
          %s218 = smul.addr %s217, 128
          %s219 = scalar_lea.hbm %s0, %s218
          %s220 = sshll.u32 %s212, 4
          %s221 = int_to_ptr.vmem [resolvable:$true] %s220
          %226 = dma.hbm_to_vmem [thread:$0]  %s219, 16384, %s221, %s209, 512, 512, 32
        $region36: #{tpu_custom_call.1} parent=31 // pred_fallthru
          _
      $region32: #{tpu_custom_call.1} parent=5 // pred_fallthru
        _
      %p227 = scmp.le.s32.totalorder 1, %s18
      %p228 = scmp.lt.s32.totalorder %s18, 3
      %p229 = pnand %p227, %p228
      %p230 = pneg %p229
      // Predicated region
      $region37: #{tpu_custom_call.1} parent=5 // pred_check
        _
      $region38: #{tpu_custom_call.1} parent=5 // pred_check_branch
        %232 = sbr.rel (%p229) target = $region40
      $region39: #{tpu_custom_call.1} parent=5 // pred_region
        %s233 = ssub.s32 %s18, 1
        %s234 = sand.u32 %s31, 1
        %s235 = scalar_lea.sflag [#allocation3], %s234
        %s236 = sand.u32 %s31, 1
        %s237 = smul.addr %s236, 1024
        %s238 = scalar_lea.vmem [#allocation2], %s237
        // Predicated region
        $region41: #{tpu_custom_call.1} parent=39 // pred_check
          %p239 = pneg %p44
        $region42: #{tpu_custom_call.1} parent=39 // pred_check_branch
          %241 = sbr.rel (%p239) target = $region44
        $region43: #{tpu_custom_call.1} parent=39 // pred_region
          %242 = dma.done %s235, 16384
        $region44: #{tpu_custom_call.1} parent=39 // pred_fallthru
          _
        // Predicated region
        $region45: #{tpu_custom_call.1} parent=39 // pred_check
          %p243 = pneg %p65
        $region46: #{tpu_custom_call.1} parent=39 // pred_check_branch
          %245 = sbr.rel (%p243) target = $region48
        $region47: #{tpu_custom_call.1} parent=39 // pred_region
          %246 = dma.done [#allocation6], 8192
        $region48: #{tpu_custom_call.1} parent=39 // pred_fallthru
          _
        // Predicated region
        $region49: #{tpu_custom_call.1} parent=39 // pred_check
          %p247 = pneg %p107
        $region50: #{tpu_custom_call.1} parent=39 // pred_check_branch
          %249 = sbr.rel (%p247) target = $region52
        $region51: #{tpu_custom_call.1} parent=39 // pred_region
          %250 = dma.done [#allocation6], 8192
        $region52: #{tpu_custom_call.1} parent=39 // pred_fallthru
          _
        %s251 = sand.u32 %s31, 1
        %s252 = scalar_lea.sflag [#allocation3], %s251
        %s253 = sand.u32 %s31, 1
        %s254 = smul.addr %s253, 1024
        %s255 = scalar_lea.vmem [#allocation2], %s254
        %p256 = pneg %p44
        %p257 = pneg %p41
        %p258 = pneg %p65
        %p259 = pneg %p62
        %p260 = pneg %p86
        %p261 = pneg %p83
        %p262 = pneg %p107
        %p263 = pneg %p104
        %p264 = pneg %p128
        %p265 = pneg %p125
        %p266 = pneg %p154
        %p267 = pneg %p151
        %s268 = sand.u32 %s141, 1
        %s269 = scalar_lea.sflag [#allocation4], %s268
        %s270 = sand.u32 %s141, 1
        %s271 = smul.addr %s270, 1024
        %s272 = scalar_lea.vmem [#allocation8], %s271
        %s273 = smul.u32 32, %s23
        %s274 = smul.u32 32, %s23
        %v275 = vld [vmem:[%s238] sm:$0xff]
        %v276 = vld [vmem:[%s238 + $0x8] sm:$0xff]
        %v277 = vld [vmem:[%s238 + $0x10] sm:$0xff]
        %v278 = vld [vmem:[%s238 + $0x18] sm:$0xff]
        %v279 = vld [vmem:[%s238 + $0x20] sm:$0xff]
        %v280 = vld [vmem:[%s238 + $0x28] sm:$0xff]
        %v281 = vld [vmem:[%s238 + $0x30] sm:$0xff]
        %v282 = vld [vmem:[%s238 + $0x38] sm:$0xff]
        %v283 = vld [vmem:[%s238 + $0x40] sm:$0xff]
        %v284 = vld [vmem:[%s238 + $0x48] sm:$0xff]
        %v285 = vld [vmem:[%s238 + $0x50] sm:$0xff]
        %v286 = vld [vmem:[%s238 + $0x58] sm:$0xff]
        %v287 = vld [vmem:[%s238 + $0x60] sm:$0xff]
        %v288 = vld [vmem:[%s238 + $0x68] sm:$0xff]
        %v289 = vld [vmem:[%s238 + $0x70] sm:$0xff]
        %v290 = vld [vmem:[%s238 + $0x78] sm:$0xff]
        %v291 = vld [vmem:[%s238 + $0x80] sm:$0xff]
        %v292 = vld [vmem:[%s238 + $0x88] sm:$0xff]
        %v293 = vld [vmem:[%s238 + $0x90] sm:$0xff]
        %v294 = vld [vmem:[%s238 + $0x98] sm:$0xff]
        %v295 = vld [vmem:[%s238 + $0xa0] sm:$0xff]
        %v296 = vld [vmem:[%s238 + $0xa8] sm:$0xff]
        %v297 = vld [vmem:[%s238 + $0xb0] sm:$0xff]
        %v298 = vld [vmem:[%s238 + $0xb8] sm:$0xff]
        %v299 = vld [vmem:[%s238 + $0xc0] sm:$0xff]
        %v300 = vld [vmem:[%s238 + $0xc8] sm:$0xff]
        %v301 = vld [vmem:[%s238 + $0xd0] sm:$0xff]
        %v302 = vld [vmem:[%s238 + $0xd8] sm:$0xff]
        %v303 = vld [vmem:[%s238 + $0xe0] sm:$0xff]
        %v304 = vld [vmem:[%s238 + $0xe8] sm:$0xff]
        %v305 = vld [vmem:[%s238 + $0xf0] sm:$0xff]
        %v306 = vld [vmem:[%s238 + $0xf8] sm:$0xff]
        %v307 = vld [vmem:[%s238 + $0x100] sm:$0xff]
        %v308 = vld [vmem:[%s238 + $0x108] sm:$0xff]
        %v309 = vld [vmem:[%s238 + $0x110] sm:$0xff]
        %v310 = vld [vmem:[%s238 + $0x118] sm:$0xff]
        %v311 = vld [vmem:[%s238 + $0x120] sm:$0xff]
        %v312 = vld [vmem:[%s238 + $0x128] sm:$0xff]
        %v313 = vld [vmem:[%s238 + $0x130] sm:$0xff]
        %v314 = vld [vmem:[%s238 + $0x138] sm:$0xff]
        %v315 = vld [vmem:[%s238 + $0x140] sm:$0xff]
        %v316 = vld [vmem:[%s238 + $0x148] sm:$0xff]
        %v317 = vld [vmem:[%s238 + $0x150] sm:$0xff]
        %v318 = vld [vmem:[%s238 + $0x158] sm:$0xff]
        %v319 = vld [vmem:[%s238 + $0x160] sm:$0xff]
        %v320 = vld [vmem:[%s238 + $0x168] sm:$0xff]
        %v321 = vld [vmem:[%s238 + $0x170] sm:$0xff]
        %v322 = vld [vmem:[%s238 + $0x178] sm:$0xff]
        %v323 = vld [vmem:[%s238 + $0x180] sm:$0xff]
        %v324 = vld [vmem:[%s238 + $0x188] sm:$0xff]
        %v325 = vld [vmem:[%s238 + $0x190] sm:$0xff]
        %v326 = vld [vmem:[%s238 + $0x198] sm:$0xff]
        %v327 = vld [vmem:[%s238 + $0x1a0] sm:$0xff]
        %v328 = vld [vmem:[%s238 + $0x1a8] sm:$0xff]
        %v329 = vld [vmem:[%s238 + $0x1b0] sm:$0xff]
        %v330 = vld [vmem:[%s238 + $0x1b8] sm:$0xff]
        %v331 = vld [vmem:[%s238 + $0x1c0] sm:$0xff]
        %v332 = vld [vmem:[%s238 + $0x1c8] sm:$0xff]
        %v333 = vld [vmem:[%s238 + $0x1d0] sm:$0xff]
        %v334 = vld [vmem:[%s238 + $0x1d8] sm:$0xff]
        %v335 = vld [vmem:[%s238 + $0x1e0] sm:$0xff]
        %v336 = vld [vmem:[%s238 + $0x1e8] sm:$0xff]
        %v337 = vld [vmem:[%s238 + $0x1f0] sm:$0xff]
        %v338 = vld [vmem:[%s238 + $0x1f8] sm:$0xff]
        %v339 = vld [vmem:[%s238 + $0x200] sm:$0xff]
        %v340 = vld [vmem:[%s238 + $0x208] sm:$0xff]
        %v341 = vld [vmem:[%s238 + $0x210] sm:$0xff]
        %v342 = vld [vmem:[%s238 + $0x218] sm:$0xff]
        %v343 = vld [vmem:[%s238 + $0x220] sm:$0xff]
        %v344 = vld [vmem:[%s238 + $0x228] sm:$0xff]
        %v345 = vld [vmem:[%s238 + $0x230] sm:$0xff]
        %v346 = vld [vmem:[%s238 + $0x238] sm:$0xff]
        %v347 = vld [vmem:[%s238 + $0x240] sm:$0xff]
        %v348 = vld [vmem:[%s238 + $0x248] sm:$0xff]
        %v349 = vld [vmem:[%s238 + $0x250] sm:$0xff]
        %v350 = vld [vmem:[%s238 + $0x258] sm:$0xff]
        %v351 = vld [vmem:[%s238 + $0x260] sm:$0xff]
        %v352 = vld [vmem:[%s238 + $0x268] sm:$0xff]
        %v353 = vld [vmem:[%s238 + $0x270] sm:$0xff]
        %v354 = vld [vmem:[%s238 + $0x278] sm:$0xff]
        %v355 = vld [vmem:[%s238 + $0x280] sm:$0xff]
        %v356 = vld [vmem:[%s238 + $0x288] sm:$0xff]
        %v357 = vld [vmem:[%s238 + $0x290] sm:$0xff]
        %v358 = vld [vmem:[%s238 + $0x298] sm:$0xff]
        %v359 = vld [vmem:[%s238 + $0x2a0] sm:$0xff]
        %v360 = vld [vmem:[%s238 + $0x2a8] sm:$0xff]
        %v361 = vld [vmem:[%s238 + $0x2b0] sm:$0xff]
        %v362 = vld [vmem:[%s238 + $0x2b8] sm:$0xff]
        %v363 = vld [vmem:[%s238 + $0x2c0] sm:$0xff]
        %v364 = vld [vmem:[%s238 + $0x2c8] sm:$0xff]
        %v365 = vld [vmem:[%s238 + $0x2d0] sm:$0xff]
        %v366 = vld [vmem:[%s238 + $0x2d8] sm:$0xff]
        %v367 = vld [vmem:[%s238 + $0x2e0] sm:$0xff]
        %v368 = vld [vmem:[%s238 + $0x2e8] sm:$0xff]
        %v369 = vld [vmem:[%s238 + $0x2f0] sm:$0xff]
        %v370 = vld [vmem:[%s238 + $0x2f8] sm:$0xff]
        %v371 = vld [vmem:[%s238 + $0x300] sm:$0xff]
        %v372 = vld [vmem:[%s238 + $0x308] sm:$0xff]
        %v373 = vld [vmem:[%s238 + $0x310] sm:$0xff]
        %v374 = vld [vmem:[%s238 + $0x318] sm:$0xff]
        %v375 = vld [vmem:[%s238 + $0x320] sm:$0xff]
        %v376 = vld [vmem:[%s238 + $0x328] sm:$0xff]
        %v377 = vld [vmem:[%s238 + $0x330] sm:$0xff]
        %v378 = vld [vmem:[%s238 + $0x338] sm:$0xff]
        %v379 = vld [vmem:[%s238 + $0x340] sm:$0xff]
        %v380 = vld [vmem:[%s238 + $0x348] sm:$0xff]
        %v381 = vld [vmem:[%s238 + $0x350] sm:$0xff]
        %v382 = vld [vmem:[%s238 + $0x358] sm:$0xff]
        %v383 = vld [vmem:[%s238 + $0x360] sm:$0xff]
        %v384 = vld [vmem:[%s238 + $0x368] sm:$0xff]
        %v385 = vld [vmem:[%s238 + $0x370] sm:$0xff]
        %v386 = vld [vmem:[%s238 + $0x378] sm:$0xff]
        %v387 = vld [vmem:[%s238 + $0x380] sm:$0xff]
        %v388 = vld [vmem:[%s238 + $0x388] sm:$0xff]
        %v389 = vld [vmem:[%s238 + $0x390] sm:$0xff]
        %v390 = vld [vmem:[%s238 + $0x398] sm:$0xff]
        %v391 = vld [vmem:[%s238 + $0x3a0] sm:$0xff]
        %v392 = vld [vmem:[%s238 + $0x3a8] sm:$0xff]
        %v393 = vld [vmem:[%s238 + $0x3b0] sm:$0xff]
        %v394 = vld [vmem:[%s238 + $0x3b8] sm:$0xff]
        %v395 = vld [vmem:[%s238 + $0x3c0] sm:$0xff]
        %v396 = vld [vmem:[%s238 + $0x3c8] sm:$0xff]
        %v397 = vld [vmem:[%s238 + $0x3d0] sm:$0xff]
        %v398 = vld [vmem:[%s238 + $0x3d8] sm:$0xff]
        %v399 = vld [vmem:[%s238 + $0x3e0] sm:$0xff]
        %v400 = vld [vmem:[%s238 + $0x3e8] sm:$0xff]
        %v401 = vld [vmem:[%s238 + $0x3f0] sm:$0xff]
        %v402 = vld [vmem:[%s238 + $0x3f8] sm:$0xff]
        %v403 = vld [vmem:[#allocation5] sm:$0xff]
        %v404 = vld [vmem:[#allocation5 + $0x8] sm:$0xff]
        %v405 = vld [vmem:[#allocation5 + $0x10] sm:$0xff]
        %v406 = vld [vmem:[#allocation5 + $0x18] sm:$0xff]
        %v407 = vld [vmem:[#allocation5 + $0x20] sm:$0xff]
        %v408 = vld [vmem:[#allocation5 + $0x28] sm:$0xff]
        %v409 = vld [vmem:[#allocation5 + $0x30] sm:$0xff]
        %v410 = vld [vmem:[#allocation5 + $0x38] sm:$0xff]
        %v411 = vld [vmem:[#allocation5 + $0x40] sm:$0xff]
        %v412 = vld [vmem:[#allocation5 + $0x48] sm:$0xff]
        %v413 = vld [vmem:[#allocation5 + $0x50] sm:$0xff]
        %v414 = vld [vmem:[#allocation5 + $0x58] sm:$0xff]
        %v415 = vld [vmem:[#allocation5 + $0x60] sm:$0xff]
        %v416 = vld [vmem:[#allocation5 + $0x68] sm:$0xff]
        %v417 = vld [vmem:[#allocation5 + $0x70] sm:$0xff]
        %v418 = vld [vmem:[#allocation5 + $0x78] sm:$0xff]
        %v419 = vld [vmem:[#allocation5 + $0x80] sm:$0xff]
        %v420 = vld [vmem:[#allocation5 + $0x88] sm:$0xff]
        %v421 = vld [vmem:[#allocation5 + $0x90] sm:$0xff]
        %v422 = vld [vmem:[#allocation5 + $0x98] sm:$0xff]
        %v423 = vld [vmem:[#allocation5 + $0xa0] sm:$0xff]
        %v424 = vld [vmem:[#allocation5 + $0xa8] sm:$0xff]
        %v425 = vld [vmem:[#allocation5 + $0xb0] sm:$0xff]
        %v426 = vld [vmem:[#allocation5 + $0xb8] sm:$0xff]
        %v427 = vld [vmem:[#allocation5 + $0xc0] sm:$0xff]
        %v428 = vld [vmem:[#allocation5 + $0xc8] sm:$0xff]
        %v429 = vld [vmem:[#allocation5 + $0xd0] sm:$0xff]
        %v430 = vld [vmem:[#allocation5 + $0xd8] sm:$0xff]
        %v431 = vld [vmem:[#allocation5 + $0xe0] sm:$0xff]
        %v432 = vld [vmem:[#allocation5 + $0xe8] sm:$0xff]
        %v433 = vld [vmem:[#allocation5 + $0xf0] sm:$0xff]
        %v434 = vld [vmem:[#allocation5 + $0xf8] sm:$0xff]
        %v435 = vld [vmem:[#allocation5 + $0x100] sm:$0xff]
        %v436 = vld [vmem:[#allocation5 + $0x108] sm:$0xff]
        %v437 = vld [vmem:[#allocation5 + $0x110] sm:$0xff]
        %v438 = vld [vmem:[#allocation5 + $0x118] sm:$0xff]
        %v439 = vld [vmem:[#allocation5 + $0x120] sm:$0xff]
        %v440 = vld [vmem:[#allocation5 + $0x128] sm:$0xff]
        %v441 = vld [vmem:[#allocation5 + $0x130] sm:$0xff]
        %v442 = vld [vmem:[#allocation5 + $0x138] sm:$0xff]
        %v443 = vld [vmem:[#allocation5 + $0x140] sm:$0xff]
        %v444 = vld [vmem:[#allocation5 + $0x148] sm:$0xff]
        %v445 = vld [vmem:[#allocation5 + $0x150] sm:$0xff]
        %v446 = vld [vmem:[#allocation5 + $0x158] sm:$0xff]
        %v447 = vld [vmem:[#allocation5 + $0x160] sm:$0xff]
        %v448 = vld [vmem:[#allocation5 + $0x168] sm:$0xff]
        %v449 = vld [vmem:[#allocation5 + $0x170] sm:$0xff]
        %v450 = vld [vmem:[#allocation5 + $0x178] sm:$0xff]
        %v451 = vld [vmem:[#allocation5 + $0x180] sm:$0xff]
        %v452 = vld [vmem:[#allocation5 + $0x188] sm:$0xff]
        %v453 = vld [vmem:[#allocation5 + $0x190] sm:$0xff]
        %v454 = vld [vmem:[#allocation5 + $0x198] sm:$0xff]
        %v455 = vld [vmem:[#allocation5 + $0x1a0] sm:$0xff]
        %v456 = vld [vmem:[#allocation5 + $0x1a8] sm:$0xff]
        %v457 = vld [vmem:[#allocation5 + $0x1b0] sm:$0xff]
        %v458 = vld [vmem:[#allocation5 + $0x1b8] sm:$0xff]
        %v459 = vld [vmem:[#allocation5 + $0x1c0] sm:$0xff]
        %v460 = vld [vmem:[#allocation5 + $0x1c8] sm:$0xff]
        %v461 = vld [vmem:[#allocation5 + $0x1d0] sm:$0xff]
        %v462 = vld [vmem:[#allocation5 + $0x1d8] sm:$0xff]
        %v463 = vld [vmem:[#allocation5 + $0x1e0] sm:$0xff]
        %v464 = vld [vmem:[#allocation5 + $0x1e8] sm:$0xff]
        %v465 = vld [vmem:[#allocation5 + $0x1f0] sm:$0xff]
        %v466 = vld [vmem:[#allocation5 + $0x1f8] sm:$0xff]
        %v467 = vld [vmem:[%s2] sm:$0x1]
        %v469 = vlaneseq
        %v470 = vshrl.u32 %v469, 7
        %v471 = vsub.s32 0, %v470
        %v472 = vrot.slane %v467, %v471
        %474 = vmatprep.subr.mxu0 0.0
        %475 = vmatpush1.msra.mxu0 %v403
        %476 = vmatprep.subr.mxu0 0.0
        %477 = vmatpush1.msra.mxu0 %v404
        %478 = vmatprep.subr.mxu0 0.0
        %479 = vmatpush1.msra.mxu0 %v405
        %480 = vmatprep.subr.mxu0 0.0
        %481 = vmatpush1.msra.mxu0 %v406
        %482 = vmatprep.subr.mxu0 0.0
        %483 = vmatpush1.msra.mxu0 %v407
        %484 = vmatprep.subr.mxu0 0.0
        %485 = vmatpush1.msra.mxu0 %v408
        %486 = vmatprep.subr.mxu0 0.0
        %487 = vmatpush1.msra.mxu0 %v409
        %488 = vmatprep.subr.mxu0 0.0
        %489 = vmatpush1.msra.mxu0 %v410
        %490 = vmatprep.subr.mxu0 0.0
        %491 = vmatpush1.msra.mxu0 %v411
        %492 = vmatprep.subr.mxu0 0.0
        %493 = vmatpush1.msra.mxu0 %v412
        %494 = vmatprep.subr.mxu0 0.0
        %495 = vmatpush1.msra.mxu0 %v413
        %496 = vmatprep.subr.mxu0 0.0
        %497 = vmatpush1.msra.mxu0 %v414
        %498 = vmatprep.subr.mxu0 0.0
        %499 = vmatpush1.msra.mxu0 %v415
        %500 = vmatprep.subr.mxu0 0.0
        %501 = vmatpush1.msra.mxu0 %v416
        %502 = vmatprep.subr.mxu0 0.0
        %503 = vmatpush1.msra.mxu0 %v417
        %504 = vmatprep.subr.mxu0 0.0
        %505 = vmatpush1.msra.mxu0 %v418
        %506 = vmatprep.subr.mxu0 0.0
        %507 = vmatpush1.msra.mxu0 %v419
        %508 = vmatprep.subr.mxu0 0.0
        %509 = vmatpush1.msra.mxu0 %v420
        %510 = vmatprep.subr.mxu0 0.0
        %511 = vmatpush1.msra.mxu0 %v421
        %512 = vmatprep.subr.mxu0 0.0
        %513 = vmatpush1.msra.mxu0 %v422
        %514 = vmatprep.subr.mxu0 0.0
        %515 = vmatpush1.msra.mxu0 %v423
        %516 = vmatprep.subr.mxu0 0.0
        %517 = vmatpush1.msra.mxu0 %v424
        %518 = vmatprep.subr.mxu0 0.0
        %519 = vmatpush1.msra.mxu0 %v425
        %520 = vmatprep.subr.mxu0 0.0
        %521 = vmatpush1.msra.mxu0 %v426
        %522 = vmatprep.subr.mxu0 0.0
        %523 = vmatpush1.msra.mxu0 %v427
        %524 = vmatprep.subr.mxu0 0.0
        %525 = vmatpush1.msra.mxu0 %v428
        %526 = vmatprep.subr.mxu0 0.0
        %527 = vmatpush1.msra.mxu0 %v429
        %528 = vmatprep.subr.mxu0 0.0
        %529 = vmatpush1.msra.mxu0 %v430
        %530 = vmatprep.subr.mxu0 0.0
        %531 = vmatpush1.msra.mxu0 %v431
        %532 = vmatprep.subr.mxu0 0.0
        %533 = vmatpush1.msra.mxu0 %v432
        %534 = vmatprep.subr.mxu0 0.0
        %535 = vmatpush1.msra.mxu0 %v433
        %536 = vmatprep.subr.mxu0 0.0
        %537 = vmatpush1.msra.mxu0 %v434
        %538 = vmatprep.mubr.f32.mxu0 %v276
        %539 = vmatmul.mubr.f32.gmra.mrb[0].mxu0 %v275
        %v540 = vpop.f32.mrb[0].mxu0
        %v541 = vadd.f32 %v472, %v540
        %v542 = vpop.f32.mrb[0].mxu0
        %543 = vmatprep.mubr.f32.mxu0 %v280
        %544 = vmatmul.mubr.f32.gmra.mrb[0].mxu0 %v279
        %v545 = vpop.f32.mrb[0].mxu0
        %v546 = vadd.f32 %v472, %v545
        %v547 = vpop.f32.mrb[0].mxu0
        %548 = vmatprep.mubr.f32.mxu0 %v284
        %549 = vmatmul.mubr.f32.gmra.mrb[0].mxu0 %v283
        %v550 = vpop.f32.mrb[0].mxu0
        %v551 = vadd.f32 %v472, %v550
        %v552 = vpop.f32.mrb[0].mxu0
        %553 = vmatprep.mubr.f32.mxu0 %v288
        %554 = vmatmul.mubr.f32.gmra.mrb[0].mxu0 %v287
        %v555 = vpop.f32.mrb[0].mxu0
        %v556 = vadd.f32 %v472, %v555
        %v557 = vpop.f32.mrb[0].mxu0
        %558 = vmatprep.mubr.f32.mxu0 %v292
        %559 = vmatmul.mubr.f32.gmra.mrb[0].mxu0 %v291
        %v560 = vpop.f32.mrb[0].mxu0
        %v561 = vadd.f32 %v472, %v560
        %v562 = vpop.f32.mrb[0].mxu0
        %563 = vmatprep.mubr.f32.mxu0 %v296
        %564 = vmatmul.mubr.f32.gmra.mrb[0].mxu0 %v295
        %v565 = vpop.f32.mrb[0].mxu0
        %v566 = vadd.f32 %v472, %v565
        %v567 = vpop.f32.mrb[0].mxu0
        %568 = vmatprep.mubr.f32.mxu0 %v300
        %569 = vmatmul.mubr.f32.gmra.mrb[0].mxu0 %v299
        %v570 = vpop.f32.mrb[0].mxu0
        %v571 = vadd.f32 %v472, %v570
        %v572 = vpop.f32.mrb[0].mxu0
        %573 = vmatprep.mubr.f32.mxu0 %v304
        %574 = vmatmul.mubr.f32.gmra.mrb[0].mxu0 %v303
        %v575 = vpop.f32.mrb[0].mxu0
        %v576 = vadd.f32 %v472, %v575
        %v577 = vpop.f32.mrb[0].mxu0
        %578 = vmatprep.mubr.f32.mxu0 %v308
        %579 = vmatmul.mubr.f32.gmra.mrb[0].mxu0 %v307
        %v580 = vpop.f32.mrb[0].mxu0
        %v581 = vadd.f32 %v472, %v580
        %v582 = vpop.f32.mrb[0].mxu0
        %583 = vmatprep.mubr.f32.mxu0 %v312
        %584 = vmatmul.mubr.f32.gmra.mrb[0].mxu0 %v311
        %v585 = vpop.f32.mrb[0].mxu0
        %v586 = vadd.f32 %v472, %v585
        %v587 = vpop.f32.mrb[0].mxu0
        %588 = vmatprep.mubr.f32.mxu0 %v316
        %589 = vmatmul.mubr.f32.gmra.mrb[0].mxu0 %v315
        %v590 = vpop.f32.mrb[0].mxu0
        %v591 = vadd.f32 %v472, %v590
        %v592 = vpop.f32.mrb[0].mxu0
        %593 = vmatprep.mubr.f32.mxu0 %v320
        %594 = vmatmul.mubr.f32.gmra.mrb[0].mxu0 %v319
        %v595 = vpop.f32.mrb[0].mxu0
        %v596 = vadd.f32 %v472, %v595
        %v597 = vpop.f32.mrb[0].mxu0
        %598 = vmatprep.mubr.f32.mxu0 %v324
        %599 = vmatmul.mubr.f32.gmra.mrb[0].mxu0 %v323
        %v600 = vpop.f32.mrb[0].mxu0
        %v601 = vadd.f32 %v472, %v600
        %v602 = vpop.f32.mrb[0].mxu0
        %603 = vmatprep.mubr.f32.mxu0 %v328
        %604 = vmatmul.mubr.f32.gmra.mrb[0].mxu0 %v327
        %v605 = vpop.f32.mrb[0].mxu0
        %v606 = vadd.f32 %v472, %v605
        %v607 = vpop.f32.mrb[0].mxu0
        %608 = vmatprep.mubr.f32.mxu0 %v332
        %609 = vmatmul.mubr.f32.gmra.mrb[0].mxu0 %v331
        %v610 = vpop.f32.mrb[0].mxu0
        %v611 = vadd.f32 %v472, %v610
        %v612 = vpop.f32.mrb[0].mxu0
        %613 = vmatprep.mubr.f32.mxu0 %v336
        %614 = vmatmul.mubr.f32.gmra.mrb[0].mxu0 %v335
        %v615 = vpop.f32.mrb[0].mxu0
        %v616 = vadd.f32 %v472, %v615
        %v617 = vpop.f32.mrb[0].mxu0
        %618 = vmatprep.mubr.f32.mxu0 %v340
        %619 = vmatmul.mubr.f32.gmra.mrb[0].mxu0 %v339
        %v620 = vpop.f32.mrb[0].mxu0
        %v621 = vadd.f32 %v472, %v620
        %v622 = vpop.f32.mrb[0].mxu0
        %623 = vmatprep.mubr.f32.mxu0 %v344
        %624 = vmatmul.mubr.f32.gmra.mrb[0].mxu0 %v343
        %v625 = vpop.f32.mrb[0].mxu0
        %v626 = vadd.f32 %v472, %v625
        %v627 = vpop.f32.mrb[0].mxu0
        %628 = vmatprep.mubr.f32.mxu0 %v348
        %629 = vmatmul.mubr.f32.gmra.mrb[0].mxu0 %v347
        %v630 = vpop.f32.mrb[0].mxu0
        %v631 = vadd.f32 %v472, %v630
        %v632 = vpop.f32.mrb[0].mxu0
        %633 = vmatprep.mubr.f32.mxu0 %v352
        %634 = vmatmul.mubr.f32.gmra.mrb[0].mxu0 %v351
        %v635 = vpop.f32.mrb[0].mxu0
        %v636 = vadd.f32 %v472, %v635
        %v637 = vpop.f32.mrb[0].mxu0
        %638 = vmatprep.mubr.f32.mxu0 %v356
        %639 = vmatmul.mubr.f32.gmra.mrb[0].mxu0 %v355
        %v640 = vpop.f32.mrb[0].mxu0
        %v641 = vadd.f32 %v472, %v640
        %v642 = vpop.f32.mrb[0].mxu0
        %643 = vmatprep.mubr.f32.mxu0 %v360
        %644 = vmatmul.mubr.f32.gmra.mrb[0].mxu0 %v359
        %v645 = vpop.f32.mrb[0].mxu0
        %v646 = vadd.f32 %v472, %v645
        %v647 = vpop.f32.mrb[0].mxu0
        %648 = vmatprep.mubr.f32.mxu0 %v364
        %649 = vmatmul.mubr.f32.gmra.mrb[0].mxu0 %v363
        %v650 = vpop.f32.mrb[0].mxu0
        %v651 = vadd.f32 %v472, %v650
        %v652 = vpop.f32.mrb[0].mxu0
        %653 = vmatprep.mubr.f32.mxu0 %v368
        %654 = vmatmul.mubr.f32.gmra.mrb[0].mxu0 %v367
        %v655 = vpop.f32.mrb[0].mxu0
        %v656 = vadd.f32 %v472, %v655
        %v657 = vpop.f32.mrb[0].mxu0
        %658 = vmatprep.mubr.f32.mxu0 %v372
        %659 = vmatmul.mubr.f32.gmra.mrb[0].mxu0 %v371
        %v660 = vpop.f32.mrb[0].mxu0
        %v661 = vadd.f32 %v472, %v660
        %v662 = vpop.f32.mrb[0].mxu0
        %663 = vmatprep.mubr.f32.mxu0 %v376
        %664 = vmatmul.mubr.f32.gmra.mrb[0].mxu0 %v375
        %v665 = vpop.f32.mrb[0].mxu0
        %v666 = vadd.f32 %v472, %v665
        %v667 = vpop.f32.mrb[0].mxu0
        %668 = vmatprep.mubr.f32.mxu0 %v380
        %669 = vmatmul.mubr.f32.gmra.mrb[0].mxu0 %v379
        %v670 = vpop.f32.mrb[0].mxu0
        %v671 = vadd.f32 %v472, %v670
        %v672 = vpop.f32.mrb[0].mxu0
        %673 = vmatprep.mubr.f32.mxu0 %v384
        %674 = vmatmul.mubr.f32.gmra.mrb[0].mxu0 %v383
        %v675 = vpop.f32.mrb[0].mxu0
        %v676 = vadd.f32 %v472, %v675
        %v677 = vpop.f32.mrb[0].mxu0
        %678 = vmatprep.mubr.f32.mxu0 %v388
        %679 = vmatmul.mubr.f32.gmra.mrb[0].mxu0 %v387
        %v680 = vpop.f32.mrb[0].mxu0
        %v681 = vadd.f32 %v472, %v680
        %v682 = vpop.f32.mrb[0].mxu0
        %683 = vmatprep.mubr.f32.mxu0 %v392
        %684 = vmatmul.mubr.f32.gmra.mrb[0].mxu0 %v391
        %v685 = vpop.f32.mrb[0].mxu0
        %v686 = vadd.f32 %v472, %v685
        %v687 = vpop.f32.mrb[0].mxu0
        %688 = vmatprep.mubr.f32.mxu0 %v396
        %689 = vmatmul.mubr.f32.gmra.mrb[0].mxu0 %v395
        %v690 = vpop.f32.mrb[0].mxu0
        %v691 = vadd.f32 %v472, %v690
        %v692 = vpop.f32.mrb[0].mxu0
        %693 = vmatprep.mubr.f32.mxu0 %v400
        %694 = vmatmul.mubr.f32.gmra.mrb[0].mxu0 %v399
        %v695 = vpop.f32.mrb[0].mxu0
        %v696 = vadd.f32 %v472, %v695
        %v697 = vpop.f32.mrb[0].mxu0
        %698 = vdwg.mxu0
        %699 = vmatprep.subr.mxu0 0.0
        %700 = vmatpush1.msra.mxu0 %v435
        %701 = vmatprep.subr.mxu0 0.0
        %702 = vmatpush1.msra.mxu0 %v436
        %703 = vmatprep.subr.mxu0 0.0
        %704 = vmatpush1.msra.mxu0 %v437
        %705 = vmatprep.subr.mxu0 0.0
        %706 = vmatpush1.msra.mxu0 %v438
        %707 = vmatprep.subr.mxu0 0.0
        %708 = vmatpush1.msra.mxu0 %v439
        %709 = vmatprep.subr.mxu0 0.0
        %710 = vmatpush1.msra.mxu0 %v440
        %711 = vmatprep.subr.mxu0 0.0
        %712 = vmatpush1.msra.mxu0 %v441
        %713 = vmatprep.subr.mxu0 0.0
        %714 = vmatpush1.msra.mxu0 %v442
        %715 = vmatprep.subr.mxu0 0.0
        %716 = vmatpush1.msra.mxu0 %v443
        %717 = vmatprep.subr.mxu0 0.0
        %718 = vmatpush1.msra.mxu0 %v444
        %719 = vmatprep.subr.mxu0 0.0
        %720 = vmatpush1.msra.mxu0 %v445
        %721 = vmatprep.subr.mxu0 0.0
        %722 = vmatpush1.msra.mxu0 %v446
        %723 = vmatprep.subr.mxu0 0.0
        %724 = vmatpush1.msra.mxu0 %v447
        %725 = vmatprep.subr.mxu0 0.0
        %726 = vmatpush1.msra.mxu0 %v448
        %727 = vmatprep.subr.mxu0 0.0
        %728 = vmatpush1.msra.mxu0 %v449
        %729 = vmatprep.subr.mxu0 0.0
        %730 = vmatpush1.msra.mxu0 %v450
        %731 = vmatprep.subr.mxu0 0.0
        %732 = vmatpush1.msra.mxu0 %v451
        %733 = vmatprep.subr.mxu0 0.0
        %734 = vmatpush1.msra.mxu0 %v452
        %735 = vmatprep.subr.mxu0 0.0
        %736 = vmatpush1.msra.mxu0 %v453
        %737 = vmatprep.subr.mxu0 0.0
        %738 = vmatpush1.msra.mxu0 %v454
        %739 = vmatprep.subr.mxu0 0.0
        %740 = vmatpush1.msra.mxu0 %v455
        %741 = vmatprep.subr.mxu0 0.0
        %742 = vmatpush1.msra.mxu0 %v456
        %743 = vmatprep.subr.mxu0 0.0
        %744 = vmatpush1.msra.mxu0 %v457
        %745 = vmatprep.subr.mxu0 0.0
        %746 = vmatpush1.msra.mxu0 %v458
        %747 = vmatprep.subr.mxu0 0.0
        %748 = vmatpush1.msra.mxu0 %v459
        %749 = vmatprep.subr.mxu0 0.0
        %750 = vmatpush1.msra.mxu0 %v460
        %751 = vmatprep.subr.mxu0 0.0
        %752 = vmatpush1.msra.mxu0 %v461
        %753 = vmatprep.subr.mxu0 0.0
        %754 = vmatpush1.msra.mxu0 %v462
        %755 = vmatprep.subr.mxu0 0.0
        %756 = vmatpush1.msra.mxu0 %v463
        %757 = vmatprep.subr.mxu0 0.0
        %758 = vmatpush1.msra.mxu0 %v464
        %759 = vmatprep.subr.mxu0 0.0
        %760 = vmatpush1.msra.mxu0 %v465
        %761 = vmatprep.subr.mxu0 0.0
        %762 = vmatpush1.msra.mxu0 %v466
        %763 = vmatprep.mubr.f32.mxu0 %v278
        %764 = vmatmul.mubr.f32.gmra.mrb[0].mxu0 %v277
        %v765 = vpop.f32.mrb[0].mxu0
        %v766 = vadd.f32 %v541, %v765
        %v767 = vpop.f32.mrb[0].mxu0
        %768 = vmatprep.mubr.f32.mxu0 %v282
        %769 = vmatmul.mubr.f32.gmra.mrb[0].mxu0 %v281
        %v770 = vpop.f32.mrb[0].mxu0
        %v771 = vadd.f32 %v546, %v770
        %v772 = vpop.f32.mrb[0].mxu0
        %773 = vmatprep.mubr.f32.mxu0 %v286
        %774 = vmatmul.mubr.f32.gmra.mrb[0].mxu0 %v285
        %v775 = vpop.f32.mrb[0].mxu0
        %v776 = vadd.f32 %v551, %v775
        %v777 = vpop.f32.mrb[0].mxu0
        %778 = vmatprep.mubr.f32.mxu0 %v290
        %779 = vmatmul.mubr.f32.gmra.mrb[0].mxu0 %v289
        %v780 = vpop.f32.mrb[0].mxu0
        %v781 = vadd.f32 %v556, %v780
        %v782 = vpop.f32.mrb[0].mxu0
        %783 = vmatprep.mubr.f32.mxu0 %v294
        %784 = vmatmul.mubr.f32.gmra.mrb[0].mxu0 %v293
        %v785 = vpop.f32.mrb[0].mxu0
        %v786 = vadd.f32 %v561, %v785
        %v787 = vpop.f32.mrb[0].mxu0
        %788 = vmatprep.mubr.f32.mxu0 %v298
        %789 = vmatmul.mubr.f32.gmra.mrb[0].mxu0 %v297
        %v790 = vpop.f32.mrb[0].mxu0
        %v791 = vadd.f32 %v566, %v790
        %v792 = vpop.f32.mrb[0].mxu0
        %793 = vmatprep.mubr.f32.mxu0 %v302
        %794 = vmatmul.mubr.f32.gmra.mrb[0].mxu0 %v301
        %v795 = vpop.f32.mrb[0].mxu0
        %v796 = vadd.f32 %v571, %v795
        %v797 = vpop.f32.mrb[0].mxu0
        %798 = vmatprep.mubr.f32.mxu0 %v306
        %799 = vmatmul.mubr.f32.gmra.mrb[0].mxu0 %v305
        %v800 = vpop.f32.mrb[0].mxu0
        %v801 = vadd.f32 %v576, %v800
        %v802 = vpop.f32.mrb[0].mxu0
        %803 = vmatprep.mubr.f32.mxu0 %v310
        %804 = vmatmul.mubr.f32.gmra.mrb[0].mxu0 %v309
        %v805 = vpop.f32.mrb[0].mxu0
        %v806 = vadd.f32 %v581, %v805
        %v807 = vpop.f32.mrb[0].mxu0
        %808 = vmatprep.mubr.f32.mxu0 %v314
        %809 = vmatmul.mubr.f32.gmra.mrb[0].mxu0 %v313
        %v810 = vpop.f32.mrb[0].mxu0
        %v811 = vadd.f32 %v586, %v810
        %v812 = vpop.f32.mrb[0].mxu0
        %813 = vmatprep.mubr.f32.mxu0 %v318
        %814 = vmatmul.mubr.f32.gmra.mrb[0].mxu0 %v317
        %v815 = vpop.f32.mrb[0].mxu0
        %v816 = vadd.f32 %v591, %v815
        %v817 = vpop.f32.mrb[0].mxu0
        %818 = vmatprep.mubr.f32.mxu0 %v322
        %819 = vmatmul.mubr.f32.gmra.mrb[0].mxu0 %v321
        %v820 = vpop.f32.mrb[0].mxu0
        %v821 = vadd.f32 %v596, %v820
        %v822 = vpop.f32.mrb[0].mxu0
        %823 = vmatprep.mubr.f32.mxu0 %v326
        %824 = vmatmul.mubr.f32.gmra.mrb[0].mxu0 %v325
        %v825 = vpop.f32.mrb[0].mxu0
        %v826 = vadd.f32 %v601, %v825
        %v827 = vpop.f32.mrb[0].mxu0
        %828 = vmatprep.mubr.f32.mxu0 %v330
        %829 = vmatmul.mubr.f32.gmra.mrb[0].mxu0 %v329
        %v830 = vpop.f32.mrb[0].mxu0
        %v831 = vadd.f32 %v606, %v830
        %v832 = vpop.f32.mrb[0].mxu0
        %833 = vmatprep.mubr.f32.mxu0 %v334
        %834 = vmatmul.mubr.f32.gmra.mrb[0].mxu0 %v333
        %v835 = vpop.f32.mrb[0].mxu0
        %v836 = vadd.f32 %v611, %v835
        %v837 = vpop.f32.mrb[0].mxu0
        %838 = vmatprep.mubr.f32.mxu0 %v338
        %839 = vmatmul.mubr.f32.gmra.mrb[0].mxu0 %v337
        %v840 = vpop.f32.mrb[0].mxu0
        %v841 = vadd.f32 %v616, %v840
        %v842 = vpop.f32.mrb[0].mxu0
        %843 = vmatprep.mubr.f32.mxu0 %v342
        %844 = vmatmul.mubr.f32.gmra.mrb[0].mxu0 %v341
        %v845 = vpop.f32.mrb[0].mxu0
        %v846 = vadd.f32 %v621, %v845
        %v847 = vpop.f32.mrb[0].mxu0
        %848 = vmatprep.mubr.f32.mxu0 %v346
        %849 = vmatmul.mubr.f32.gmra.mrb[0].mxu0 %v345
        %v850 = vpop.f32.mrb[0].mxu0
        %v851 = vadd.f32 %v626, %v850
        %v852 = vpop.f32.mrb[0].mxu0
        %853 = vmatprep.mubr.f32.mxu0 %v350
        %854 = vmatmul.mubr.f32.gmra.mrb[0].mxu0 %v349
        %v855 = vpop.f32.mrb[0].mxu0
        %v856 = vadd.f32 %v631, %v855
        %v857 = vpop.f32.mrb[0].mxu0
        %858 = vmatprep.mubr.f32.mxu0 %v354
        %859 = vmatmul.mubr.f32.gmra.mrb[0].mxu0 %v353
        %v860 = vpop.f32.mrb[0].mxu0
        %v861 = vadd.f32 %v636, %v860
        %v862 = vpop.f32.mrb[0].mxu0
        %863 = vmatprep.mubr.f32.mxu0 %v358
        %864 = vmatmul.mubr.f32.gmra.mrb[0].mxu0 %v357
        %v865 = vpop.f32.mrb[0].mxu0
        %v866 = vadd.f32 %v641, %v865
        %v867 = vpop.f32.mrb[0].mxu0
        %868 = vmatprep.mubr.f32.mxu0 %v362
        %869 = vmatmul.mubr.f32.gmra.mrb[0].mxu0 %v361
        %v870 = vpop.f32.mrb[0].mxu0
        %v871 = vadd.f32 %v646, %v870
        %v872 = vpop.f32.mrb[0].mxu0
        %873 = vmatprep.mubr.f32.mxu0 %v366
        %874 = vmatmul.mubr.f32.gmra.mrb[0].mxu0 %v365
        %v875 = vpop.f32.mrb[0].mxu0
        %v876 = vadd.f32 %v651, %v875
        %v877 = vpop.f32.mrb[0].mxu0
        %878 = vmatprep.mubr.f32.mxu0 %v370
        %879 = vmatmul.mubr.f32.gmra.mrb[0].mxu0 %v369
        %v880 = vpop.f32.mrb[0].mxu0
        %v881 = vadd.f32 %v656, %v880
        %v882 = vpop.f32.mrb[0].mxu0
        %883 = vmatprep.mubr.f32.mxu0 %v374
        %884 = vmatmul.mubr.f32.gmra.mrb[0].mxu0 %v373
        %v885 = vpop.f32.mrb[0].mxu0
        %v886 = vadd.f32 %v661, %v885
        %v887 = vpop.f32.mrb[0].mxu0
        %888 = vmatprep.mubr.f32.mxu0 %v378
        %889 = vmatmul.mubr.f32.gmra.mrb[0].mxu0 %v377
        %v890 = vpop.f32.mrb[0].mxu0
        %v891 = vadd.f32 %v666, %v890
        %v892 = vpop.f32.mrb[0].mxu0
        %893 = vmatprep.mubr.f32.mxu0 %v382
        %894 = vmatmul.mubr.f32.gmra.mrb[0].mxu0 %v381
        %v895 = vpop.f32.mrb[0].mxu0
        %v896 = vadd.f32 %v671, %v895
        %v897 = vpop.f32.mrb[0].mxu0
        %898 = vmatprep.mubr.f32.mxu0 %v386
        %899 = vmatmul.mubr.f32.gmra.mrb[0].mxu0 %v385
        %v900 = vpop.f32.mrb[0].mxu0
        %v901 = vadd.f32 %v676, %v900
        %v902 = vpop.f32.mrb[0].mxu0
        %903 = vmatprep.mubr.f32.mxu0 %v390
        %904 = vmatmul.mubr.f32.gmra.mrb[0].mxu0 %v389
        %v905 = vpop.f32.mrb[0].mxu0
        %v906 = vadd.f32 %v681, %v905
        %v907 = vpop.f32.mrb[0].mxu0
        %908 = vmatprep.mubr.f32.mxu0 %v394
        %909 = vmatmul.mubr.f32.gmra.mrb[0].mxu0 %v393
        %v910 = vpop.f32.mrb[0].mxu0
        %v911 = vadd.f32 %v686, %v910
        %v912 = vpop.f32.mrb[0].mxu0
        %913 = vmatprep.mubr.f32.mxu0 %v398
        %914 = vmatmul.mubr.f32.gmra.mrb[0].mxu0 %v397
        %v915 = vpop.f32.mrb[0].mxu0
        %v916 = vadd.f32 %v691, %v915
        %v917 = vpop.f32.mrb[0].mxu0
        %918 = vmatprep.mubr.f32.mxu0 %v402
        %919 = vmatmul.mubr.f32.gmra.mrb[0].mxu0 %v401
        %v920 = vpop.f32.mrb[0].mxu0
        %v921 = vadd.f32 %v696, %v920
        %v922 = vpop.f32.mrb[0].mxu0
        %923 = vdwg.mxu0
        %v924 = vmax.f32 %v766, 0.0
        %v925 = vmax.f32 %v771, 0.0
        %v926 = vmax.f32 %v776, 0.0
        %v927 = vmax.f32 %v781, 0.0
        %v928 = vmax.f32 %v786, 0.0
        %v929 = vmax.f32 %v791, 0.0
        %v930 = vmax.f32 %v796, 0.0
        %v931 = vmax.f32 %v801, 0.0
        %v932 = vmax.f32 %v806, 0.0
        %v933 = vmax.f32 %v811, 0.0
        %v934 = vmax.f32 %v816, 0.0
        %v935 = vmax.f32 %v821, 0.0
        %v936 = vmax.f32 %v826, 0.0
        %v937 = vmax.f32 %v831, 0.0
        %v938 = vmax.f32 %v836, 0.0
        %v939 = vmax.f32 %v841, 0.0
        %v940 = vmax.f32 %v846, 0.0
        %v941 = vmax.f32 %v851, 0.0
        %v942 = vmax.f32 %v856, 0.0
        %v943 = vmax.f32 %v861, 0.0
        %v944 = vmax.f32 %v866, 0.0
        %v945 = vmax.f32 %v871, 0.0
        %v946 = vmax.f32 %v876, 0.0
        %v947 = vmax.f32 %v881, 0.0
        %v948 = vmax.f32 %v886, 0.0
        %v949 = vmax.f32 %v891, 0.0
        %v950 = vmax.f32 %v896, 0.0
        %v951 = vmax.f32 %v901, 0.0
        %v952 = vmax.f32 %v906, 0.0
        %v953 = vmax.f32 %v911, 0.0
        %v954 = vmax.f32 %v916, 0.0
        %v955 = vmax.f32 %v921, 0.0
        %v956 = vld [vmem:[#allocation7] sm:$0xff]
        %v957 = vld [vmem:[#allocation7 + $0x8] sm:$0xff]
        %v958 = vld [vmem:[#allocation7 + $0x10] sm:$0xff]
        %v959 = vld [vmem:[#allocation7 + $0x18] sm:$0xff]
        %v960 = vld [vmem:[#allocation7 + $0x20] sm:$0xff]
        %v961 = vld [vmem:[#allocation7 + $0x28] sm:$0xff]
        %v962 = vld [vmem:[#allocation7 + $0x30] sm:$0xff]
        %v963 = vld [vmem:[#allocation7 + $0x38] sm:$0xff]
        %v964 = vld [vmem:[#allocation7 + $0x40] sm:$0xff]
        %v965 = vld [vmem:[#allocation7 + $0x48] sm:$0xff]
        %v966 = vld [vmem:[#allocation7 + $0x50] sm:$0xff]
        %v967 = vld [vmem:[#allocation7 + $0x58] sm:$0xff]
        %v968 = vld [vmem:[#allocation7 + $0x60] sm:$0xff]
        %v969 = vld [vmem:[#allocation7 + $0x68] sm:$0xff]
        %v970 = vld [vmem:[#allocation7 + $0x70] sm:$0xff]
        %v971 = vld [vmem:[#allocation7 + $0x78] sm:$0xff]
        %v972 = vld [vmem:[#allocation7 + $0x80] sm:$0xff]
        %v973 = vld [vmem:[#allocation7 + $0x88] sm:$0xff]
        %v974 = vld [vmem:[#allocation7 + $0x90] sm:$0xff]
        %v975 = vld [vmem:[#allocation7 + $0x98] sm:$0xff]
        %v976 = vld [vmem:[#allocation7 + $0xa0] sm:$0xff]
        %v977 = vld [vmem:[#allocation7 + $0xa8] sm:$0xff]
        %v978 = vld [vmem:[#allocation7 + $0xb0] sm:$0xff]
        %v979 = vld [vmem:[#allocation7 + $0xb8] sm:$0xff]
        %v980 = vld [vmem:[#allocation7 + $0xc0] sm:$0xff]
        %v981 = vld [vmem:[#allocation7 + $0xc8] sm:$0xff]
        %v982 = vld [vmem:[#allocation7 + $0xd0] sm:$0xff]
        %v983 = vld [vmem:[#allocation7 + $0xd8] sm:$0xff]
        %v984 = vld [vmem:[#allocation7 + $0xe0] sm:$0xff]
        %v985 = vld [vmem:[#allocation7 + $0xe8] sm:$0xff]
        %v986 = vld [vmem:[#allocation7 + $0xf0] sm:$0xff]
        %v987 = vld [vmem:[#allocation7 + $0xf8] sm:$0xff]
        %v988 = vld [vmem:[#allocation7 + $0x100] sm:$0xff]
        %v989 = vld [vmem:[#allocation7 + $0x108] sm:$0xff]
        %v990 = vld [vmem:[#allocation7 + $0x110] sm:$0xff]
        %v991 = vld [vmem:[#allocation7 + $0x118] sm:$0xff]
        %v992 = vld [vmem:[#allocation7 + $0x120] sm:$0xff]
        %v993 = vld [vmem:[#allocation7 + $0x128] sm:$0xff]
        %v994 = vld [vmem:[#allocation7 + $0x130] sm:$0xff]
        %v995 = vld [vmem:[#allocation7 + $0x138] sm:$0xff]
        %v996 = vld [vmem:[#allocation7 + $0x140] sm:$0xff]
        %v997 = vld [vmem:[#allocation7 + $0x148] sm:$0xff]
        %v998 = vld [vmem:[#allocation7 + $0x150] sm:$0xff]
        %v999 = vld [vmem:[#allocation7 + $0x158] sm:$0xff]
        %v1000 = vld [vmem:[#allocation7 + $0x160] sm:$0xff]
        %v1001 = vld [vmem:[#allocation7 + $0x168] sm:$0xff]
        %v1002 = vld [vmem:[#allocation7 + $0x170] sm:$0xff]
        %v1003 = vld [vmem:[#allocation7 + $0x178] sm:$0xff]
        %v1004 = vld [vmem:[#allocation7 + $0x180] sm:$0xff]
        %v1005 = vld [vmem:[#allocation7 + $0x188] sm:$0xff]
        %v1006 = vld [vmem:[#allocation7 + $0x190] sm:$0xff]
        %v1007 = vld [vmem:[#allocation7 + $0x198] sm:$0xff]
        %v1008 = vld [vmem:[#allocation7 + $0x1a0] sm:$0xff]
        %v1009 = vld [vmem:[#allocation7 + $0x1a8] sm:$0xff]
        %v1010 = vld [vmem:[#allocation7 + $0x1b0] sm:$0xff]
        %v1011 = vld [vmem:[#allocation7 + $0x1b8] sm:$0xff]
        %v1012 = vld [vmem:[#allocation7 + $0x1c0] sm:$0xff]
        %v1013 = vld [vmem:[#allocation7 + $0x1c8] sm:$0xff]
        %v1014 = vld [vmem:[#allocation7 + $0x1d0] sm:$0xff]
        %v1015 = vld [vmem:[#allocation7 + $0x1d8] sm:$0xff]
        %v1016 = vld [vmem:[#allocation7 + $0x1e0] sm:$0xff]
        %v1017 = vld [vmem:[#allocation7 + $0x1e8] sm:$0xff]
        %v1018 = vld [vmem:[#allocation7 + $0x1f0] sm:$0xff]
        %v1019 = vld [vmem:[#allocation7 + $0x1f8] sm:$0xff]
        %v1020 = vld [vmem:[%s4] sm:$0xf]
        %v1022 = vlaneseq
        %v1023 = vshrl.u32 %v1022, 7
        %v1024 = vsub.s32 0, %v1023
        %v1025 = vrot.slane %v1020, %v1024
        %v1026 = vlaneseq
        %v1027 = vshrl.u32 %v1026, 7
        %v1028 = vsub.s32 1, %v1027
        %v1029 = vrot.slane %v1020, %v1028
        %v1030 = vlaneseq
        %v1031 = vshrl.u32 %v1030, 7
        %v1032 = vsub.s32 2, %v1031
        %v1033 = vrot.slane %v1020, %v1032
        %v1034 = vlaneseq
        %v1035 = vshrl.u32 %v1034, 7
        %v1036 = vsub.s32 3, %v1035
        %v1037 = vrot.slane %v1020, %v1036
        %1042 = vmatprep.subr.mxu0 %v957
        %1043 = vmatpush1.msra.mxu0 %v956
        %1044 = vmatprep.subr.mxu0 %v961
        %1045 = vmatpush1.msra.mxu0 %v960
        %1046 = vmatprep.subr.mxu0 %v965
        %1047 = vmatpush1.msra.mxu0 %v964
        %1048 = vmatprep.subr.mxu0 %v969
        %1049 = vmatpush1.msra.mxu0 %v968
        %1050 = vmatprep.subr.mxu0 %v973
        %1051 = vmatpush1.msra.mxu0 %v972
        %1052 = vmatprep.subr.mxu0 %v977
        %1053 = vmatpush1.msra.mxu0 %v976
        %1054 = vmatprep.subr.mxu0 %v981
        %1055 = vmatpush1.msra.mxu0 %v980
        %1056 = vmatprep.subr.mxu0 %v985
        %1057 = vmatpush1.msra.mxu0 %v984
        %1058 = vmatprep.subr.mxu0 %v989
        %1059 = vmatpush1.msra.mxu0 %v988
        %1060 = vmatprep.subr.mxu0 %v993
        %1061 = vmatpush1.msra.mxu0 %v992
        %1062 = vmatprep.subr.mxu0 %v997
        %1063 = vmatpush1.msra.mxu0 %v996
        %1064 = vmatprep.subr.mxu0 %v1001
        %1065 = vmatpush1.msra.mxu0 %v1000
        %1066 = vmatprep.subr.mxu0 %v1005
        %1067 = vmatpush1.msra.mxu0 %v1004
        %1068 = vmatprep.subr.mxu0 %v1009
        %1069 = vmatpush1.msra.mxu0 %v1008
        %1070 = vmatprep.subr.mxu0 %v1013
        %1071 = vmatpush1.msra.mxu0 %v1012
        %1072 = vmatprep.subr.mxu0 %v1017
        %1073 = vmatpush1.msra.mxu0 %v1016
        %1074 = vmatprep.subr.mxu0 0.0
        %1075 = vmatpush1.msra.mxu0 0.0
        %1076 = vmatprep.subr.mxu0 0.0
        %1077 = vmatpush1.msra.mxu0 0.0
        %1078 = vmatprep.subr.mxu0 0.0
        %1079 = vmatpush1.msra.mxu0 0.0
        %1080 = vmatprep.subr.mxu0 0.0
        %1081 = vmatpush1.msra.mxu0 0.0
        %1082 = vmatprep.subr.mxu0 0.0
        %1083 = vmatpush1.msra.mxu0 0.0
        %1084 = vmatprep.subr.mxu0 0.0
        %1085 = vmatpush1.msra.mxu0 0.0
        %1086 = vmatprep.subr.mxu0 0.0
        %1087 = vmatpush1.msra.mxu0 0.0
        %1088 = vmatprep.subr.mxu0 0.0
        %1089 = vmatpush1.msra.mxu0 0.0
        %1090 = vmatprep.subr.mxu0 0.0
        %1091 = vmatpush1.msra.mxu0 0.0
        %1092 = vmatprep.subr.mxu0 0.0
        %1093 = vmatpush1.msra.mxu0 0.0
        %1094 = vmatprep.subr.mxu0 0.0
        %1095 = vmatpush1.msra.mxu0 0.0
        %1096 = vmatprep.subr.mxu0 0.0
        %1097 = vmatpush1.msra.mxu0 0.0
        %1098 = vmatprep.subr.mxu0 0.0
        %1099 = vmatpush1.msra.mxu0 0.0
        %1100 = vmatprep.subr.mxu0 0.0
        %1101 = vmatpush1.msra.mxu0 0.0
        %1102 = vmatprep.subr.mxu0 0.0
        %1103 = vmatpush1.msra.mxu0 0.0
        %1104 = vmatprep.subr.mxu0 0.0
        %1105 = vmatpush1.msra.mxu0 0.0
        %1106 = vmatprep.mubr.f32.mxu0 0.0
        %1107 = vmatmul.mubr.f32.gmra.mrb[0].mxu0 %v924
        %v1108 = vpop.f32.mrb[0].mxu0
        %v1109 = vadd.f32 %v1025, %v1108
        %v1110 = vpop.f32.mrb[0].mxu0
        %v1111 = vadd.f32 %v1029, %v1110
        %1112 = vmatprep.mubr.f32.mxu0 0.0
        %1113 = vmatmul.mubr.f32.gmra.mrb[0].mxu0 %v925
        %v1114 = vpop.f32.mrb[0].mxu0
        %v1115 = vadd.f32 %v1025, %v1114
        %v1116 = vpop.f32.mrb[0].mxu0
        %v1117 = vadd.f32 %v1029, %v1116
        %1118 = vmatprep.mubr.f32.mxu0 0.0
        %1119 = vmatmul.mubr.f32.gmra.mrb[0].mxu0 %v926
        %v1120 = vpop.f32.mrb[0].mxu0
        %v1121 = vadd.f32 %v1025, %v1120
        %v1122 = vpop.f32.mrb[0].mxu0
        %v1123 = vadd.f32 %v1029, %v1122
        %1124 = vmatprep.mubr.f32.mxu0 0.0
        %1125 = vmatmul.mubr.f32.gmra.mrb[0].mxu0 %v927
        %v1126 = vpop.f32.mrb[0].mxu0
        %v1127 = vadd.f32 %v1025, %v1126
        %v1128 = vpop.f32.mrb[0].mxu0
        %v1129 = vadd.f32 %v1029, %v1128
        %1130 = vmatprep.mubr.f32.mxu0 0.0
        %1131 = vmatmul.mubr.f32.gmra.mrb[0].mxu0 %v928
        %v1132 = vpop.f32.mrb[0].mxu0
        %v1133 = vadd.f32 %v1025, %v1132
        %v1134 = vpop.f32.mrb[0].mxu0
        %v1135 = vadd.f32 %v1029, %v1134
        %1136 = vmatprep.mubr.f32.mxu0 0.0
        %1137 = vmatmul.mubr.f32.gmra.mrb[0].mxu0 %v929
        %v1138 = vpop.f32.mrb[0].mxu0
        %v1139 = vadd.f32 %v1025, %v1138
        %v1140 = vpop.f32.mrb[0].mxu0
        %v1141 = vadd.f32 %v1029, %v1140
        %1142 = vmatprep.mubr.f32.mxu0 0.0
        %1143 = vmatmul.mubr.f32.gmra.mrb[0].mxu0 %v930
        %v1144 = vpop.f32.mrb[0].mxu0
        %v1145 = vadd.f32 %v1025, %v1144
        %v1146 = vpop.f32.mrb[0].mxu0
        %v1147 = vadd.f32 %v1029, %v1146
        %1148 = vmatprep.mubr.f32.mxu0 0.0
        %1149 = vmatmul.mubr.f32.gmra.mrb[0].mxu0 %v931
        %v1150 = vpop.f32.mrb[0].mxu0
        %v1151 = vadd.f32 %v1025, %v1150
        %v1152 = vpop.f32.mrb[0].mxu0
        %v1153 = vadd.f32 %v1029, %v1152
        %1154 = vmatprep.mubr.f32.mxu0 0.0
        %1155 = vmatmul.mubr.f32.gmra.mrb[0].mxu0 %v932
        %v1156 = vpop.f32.mrb[0].mxu0
        %v1157 = vadd.f32 %v1025, %v1156
        %v1158 = vpop.f32.mrb[0].mxu0
        %v1159 = vadd.f32 %v1029, %v1158
        %1160 = vmatprep.mubr.f32.mxu0 0.0
        %1161 = vmatmul.mubr.f32.gmra.mrb[0].mxu0 %v933
        %v1162 = vpop.f32.mrb[0].mxu0
        %v1163 = vadd.f32 %v1025, %v1162
        %v1164 = vpop.f32.mrb[0].mxu0
        %v1165 = vadd.f32 %v1029, %v1164
        %1166 = vmatprep.mubr.f32.mxu0 0.0
        %1167 = vmatmul.mubr.f32.gmra.mrb[0].mxu0 %v934
        %v1168 = vpop.f32.mrb[0].mxu0
        %v1169 = vadd.f32 %v1025, %v1168
        %v1170 = vpop.f32.mrb[0].mxu0
        %v1171 = vadd.f32 %v1029, %v1170
        %1172 = vmatprep.mubr.f32.mxu0 0.0
        %1173 = vmatmul.mubr.f32.gmra.mrb[0].mxu0 %v935
        %v1174 = vpop.f32.mrb[0].mxu0
        %v1175 = vadd.f32 %v1025, %v1174
        %v1176 = vpop.f32.mrb[0].mxu0
        %v1177 = vadd.f32 %v1029, %v1176
        %1178 = vmatprep.mubr.f32.mxu0 0.0
        %1179 = vmatmul.mubr.f32.gmra.mrb[0].mxu0 %v936
        %v1180 = vpop.f32.mrb[0].mxu0
        %v1181 = vadd.f32 %v1025, %v1180
        %v1182 = vpop.f32.mrb[0].mxu0
        %v1183 = vadd.f32 %v1029, %v1182
        %1184 = vmatprep.mubr.f32.mxu0 0.0
        %1185 = vmatmul.mubr.f32.gmra.mrb[0].mxu0 %v937
        %v1186 = vpop.f32.mrb[0].mxu0
        %v1187 = vadd.f32 %v1025, %v1186
        %v1188 = vpop.f32.mrb[0].mxu0
        %v1189 = vadd.f32 %v1029, %v1188
        %1190 = vmatprep.mubr.f32.mxu0 0.0
        %1191 = vmatmul.mubr.f32.gmra.mrb[0].mxu0 %v938
        %v1192 = vpop.f32.mrb[0].mxu0
        %v1193 = vadd.f32 %v1025, %v1192
        %v1194 = vpop.f32.mrb[0].mxu0
        %v1195 = vadd.f32 %v1029, %v1194
        %1196 = vmatprep.mubr.f32.mxu0 0.0
        %1197 = vmatmul.mubr.f32.gmra.mrb[0].mxu0 %v939
        %v1198 = vpop.f32.mrb[0].mxu0
        %v1199 = vadd.f32 %v1025, %v1198
        %v1200 = vpop.f32.mrb[0].mxu0
        %v1201 = vadd.f32 %v1029, %v1200
        %1202 = vmatprep.mubr.f32.mxu0 0.0
        %1203 = vmatmul.mubr.f32.gmra.mrb[0].mxu0 %v940
        %v1204 = vpop.f32.mrb[0].mxu0
        %v1205 = vadd.f32 %v1025, %v1204
        %v1206 = vpop.f32.mrb[0].mxu0
        %v1207 = vadd.f32 %v1029, %v1206
        %1208 = vmatprep.mubr.f32.mxu0 0.0
        %1209 = vmatmul.mubr.f32.gmra.mrb[0].mxu0 %v941
        %v1210 = vpop.f32.mrb[0].mxu0
        %v1211 = vadd.f32 %v1025, %v1210
        %v1212 = vpop.f32.mrb[0].mxu0
        %v1213 = vadd.f32 %v1029, %v1212
        %1214 = vmatprep.mubr.f32.mxu0 0.0
        %1215 = vmatmul.mubr.f32.gmra.mrb[0].mxu0 %v942
        %v1216 = vpop.f32.mrb[0].mxu0
        %v1217 = vadd.f32 %v1025, %v1216
        %v1218 = vpop.f32.mrb[0].mxu0
        %v1219 = vadd.f32 %v1029, %v1218
        %1220 = vmatprep.mubr.f32.mxu0 0.0
        %1221 = vmatmul.mubr.f32.gmra.mrb[0].mxu0 %v943
        %v1222 = vpop.f32.mrb[0].mxu0
        %v1223 = vadd.f32 %v1025, %v1222
        %v1224 = vpop.f32.mrb[0].mxu0
        %v1225 = vadd.f32 %v1029, %v1224
        %1226 = vmatprep.mubr.f32.mxu0 0.0
        %1227 = vmatmul.mubr.f32.gmra.mrb[0].mxu0 %v944
        %v1228 = vpop.f32.mrb[0].mxu0
        %v1229 = vadd.f32 %v1025, %v1228
        %v1230 = vpop.f32.mrb[0].mxu0
        %v1231 = vadd.f32 %v1029, %v1230
        %1232 = vmatprep.mubr.f32.mxu0 0.0
        %1233 = vmatmul.mubr.f32.gmra.mrb[0].mxu0 %v945
        %v1234 = vpop.f32.mrb[0].mxu0
        %v1235 = vadd.f32 %v1025, %v1234
        %v1236 = vpop.f32.mrb[0].mxu0
        %v1237 = vadd.f32 %v1029, %v1236
        %1238 = vmatprep.mubr.f32.mxu0 0.0
        %1239 = vmatmul.mubr.f32.gmra.mrb[0].mxu0 %v946
        %v1240 = vpop.f32.mrb[0].mxu0
        %v1241 = vadd.f32 %v1025, %v1240
        %v1242 = vpop.f32.mrb[0].mxu0
        %v1243 = vadd.f32 %v1029, %v1242
        %1244 = vmatprep.mubr.f32.mxu0 0.0
        %1245 = vmatmul.mubr.f32.gmra.mrb[0].mxu0 %v947
        %v1246 = vpop.f32.mrb[0].mxu0
        %v1247 = vadd.f32 %v1025, %v1246
        %v1248 = vpop.f32.mrb[0].mxu0
        %v1249 = vadd.f32 %v1029, %v1248
        %1250 = vmatprep.mubr.f32.mxu0 0.0
        %1251 = vmatmul.mubr.f32.gmra.mrb[0].mxu0 %v948
        %v1252 = vpop.f32.mrb[0].mxu0
        %v1253 = vadd.f32 %v1025, %v1252
        %v1254 = vpop.f32.mrb[0].mxu0
        %v1255 = vadd.f32 %v1029, %v1254
        %1256 = vmatprep.mubr.f32.mxu0 0.0
        %1257 = vmatmul.mubr.f32.gmra.mrb[0].mxu0 %v949
        %v1258 = vpop.f32.mrb[0].mxu0
        %v1259 = vadd.f32 %v1025, %v1258
        %v1260 = vpop.f32.mrb[0].mxu0
        %v1261 = vadd.f32 %v1029, %v1260
        %1262 = vmatprep.mubr.f32.mxu0 0.0
        %1263 = vmatmul.mubr.f32.gmra.mrb[0].mxu0 %v950
        %v1264 = vpop.f32.mrb[0].mxu0
        %v1265 = vadd.f32 %v1025, %v1264
        %v1266 = vpop.f32.mrb[0].mxu0
        %v1267 = vadd.f32 %v1029, %v1266
        %1268 = vmatprep.mubr.f32.mxu0 0.0
        %1269 = vmatmul.mubr.f32.gmra.mrb[0].mxu0 %v951
        %v1270 = vpop.f32.mrb[0].mxu0
        %v1271 = vadd.f32 %v1025, %v1270
        %v1272 = vpop.f32.mrb[0].mxu0
        %v1273 = vadd.f32 %v1029, %v1272
        %1274 = vmatprep.mubr.f32.mxu0 0.0
        %1275 = vmatmul.mubr.f32.gmra.mrb[0].mxu0 %v952
        %v1276 = vpop.f32.mrb[0].mxu0
        %v1277 = vadd.f32 %v1025, %v1276
        %v1278 = vpop.f32.mrb[0].mxu0
        %v1279 = vadd.f32 %v1029, %v1278
        %1280 = vmatprep.mubr.f32.mxu0 0.0
        %1281 = vmatmul.mubr.f32.gmra.mrb[0].mxu0 %v953
        %v1282 = vpop.f32.mrb[0].mxu0
        %v1283 = vadd.f32 %v1025, %v1282
        %v1284 = vpop.f32.mrb[0].mxu0
        %v1285 = vadd.f32 %v1029, %v1284
        %1286 = vmatprep.mubr.f32.mxu0 0.0
        %1287 = vmatmul.mubr.f32.gmra.mrb[0].mxu0 %v954
        %v1288 = vpop.f32.mrb[0].mxu0
        %v1289 = vadd.f32 %v1025, %v1288
        %v1290 = vpop.f32.mrb[0].mxu0
        %v1291 = vadd.f32 %v1029, %v1290
        %1292 = vmatprep.mubr.f32.mxu0 0.0
        %1293 = vmatmul.mubr.f32.gmra.mrb[0].mxu0 %v955
        %v1294 = vpop.f32.mrb[0].mxu0
        %v1295 = vadd.f32 %v1025, %v1294
        %v1296 = vpop.f32.mrb[0].mxu0
        %v1297 = vadd.f32 %v1029, %v1296
        %1298 = vdwg.mxu0
        %1299 = vmatprep.subr.mxu0 %v959
        %1300 = vmatpush1.msra.mxu0 %v958
        %1301 = vmatprep.subr.mxu0 %v963
        %1302 = vmatpush1.msra.mxu0 %v962
        %1303 = vmatprep.subr.mxu0 %v967
        %1304 = vmatpush1.msra.mxu0 %v966
        %1305 = vmatprep.subr.mxu0 %v971
        %1306 = vmatpush1.msra.mxu0 %v970
        %1307 = vmatprep.subr.mxu0 %v975
        %1308 = vmatpush1.msra.mxu0 %v974
        %1309 = vmatprep.subr.mxu0 %v979
        %1310 = vmatpush1.msra.mxu0 %v978
        %1311 = vmatprep.subr.mxu0 %v983
        %1312 = vmatpush1.msra.mxu0 %v982
        %1313 = vmatprep.subr.mxu0 %v987
        %1314 = vmatpush1.msra.mxu0 %v986
        %1315 = vmatprep.subr.mxu0 %v991
        %1316 = vmatpush1.msra.mxu0 %v990
        %1317 = vmatprep.subr.mxu0 %v995
        %1318 = vmatpush1.msra.mxu0 %v994
        %1319 = vmatprep.subr.mxu0 %v999
        %1320 = vmatpush1.msra.mxu0 %v998
        %1321 = vmatprep.subr.mxu0 %v1003
        %1322 = vmatpush1.msra.mxu0 %v1002
        %1323 = vmatprep.subr.mxu0 %v1007
        %1324 = vmatpush1.msra.mxu0 %v1006
        %1325 = vmatprep.subr.mxu0 %v1011
        %1326 = vmatpush1.msra.mxu0 %v1010
        %1327 = vmatprep.subr.mxu0 %v1015
        %1328 = vmatpush1.msra.mxu0 %v1014
        %1329 = vmatprep.subr.mxu0 %v1019
        %1330 = vmatpush1.msra.mxu0 %v1018
        %1331 = vmatprep.subr.mxu0 0.0
        %1332 = vmatpush1.msra.mxu0 0.0
        %1333 = vmatprep.subr.mxu0 0.0
        %1334 = vmatpush1.msra.mxu0 0.0
        %1335 = vmatprep.subr.mxu0 0.0
        %1336 = vmatpush1.msra.mxu0 0.0
        %1337 = vmatprep.subr.mxu0 0.0
        %1338 = vmatpush1.msra.mxu0 0.0
        %1339 = vmatprep.subr.mxu0 0.0
        %1340 = vmatpush1.msra.mxu0 0.0
        %1341 = vmatprep.subr.mxu0 0.0
        %1342 = vmatpush1.msra.mxu0 0.0
        %1343 = vmatprep.subr.mxu0 0.0
        %1344 = vmatpush1.msra.mxu0 0.0
        %1345 = vmatprep.subr.mxu0 0.0
        %1346 = vmatpush1.msra.mxu0 0.0
        %1347 = vmatprep.subr.mxu0 0.0
        %1348 = vmatpush1.msra.mxu0 0.0
        %1349 = vmatprep.subr.mxu0 0.0
        %1350 = vmatpush1.msra.mxu0 0.0
        %1351 = vmatprep.subr.mxu0 0.0
        %1352 = vmatpush1.msra.mxu0 0.0
        %1353 = vmatprep.subr.mxu0 0.0
        %1354 = vmatpush1.msra.mxu0 0.0
        %1355 = vmatprep.subr.mxu0 0.0
        %1356 = vmatpush1.msra.mxu0 0.0
        %1357 = vmatprep.subr.mxu0 0.0
        %1358 = vmatpush1.msra.mxu0 0.0
        %1359 = vmatprep.subr.mxu0 0.0
        %1360 = vmatpush1.msra.mxu0 0.0
        %1361 = vmatprep.subr.mxu0 0.0
        %1362 = vmatpush1.msra.mxu0 0.0
        %1363 = vmatprep.mubr.f32.mxu0 0.0
        %1364 = vmatmul.mubr.f32.gmra.mrb[0].mxu0 %v924
        %v1365 = vpop.f32.mrb[0].mxu0
        %v1366 = vadd.f32 %v1033, %v1365
        %v1367 = vpop.f32.mrb[0].mxu0
        %v1368 = vadd.f32 %v1037, %v1367
        %1369 = vmatprep.mubr.f32.mxu0 0.0
        %1370 = vmatmul.mubr.f32.gmra.mrb[0].mxu0 %v925
        %v1371 = vpop.f32.mrb[0].mxu0
        %v1372 = vadd.f32 %v1033, %v1371
        %v1373 = vpop.f32.mrb[0].mxu0
        %v1374 = vadd.f32 %v1037, %v1373
        %1375 = vmatprep.mubr.f32.mxu0 0.0
        %1376 = vmatmul.mubr.f32.gmra.mrb[0].mxu0 %v926
        %v1377 = vpop.f32.mrb[0].mxu0
        %v1378 = vadd.f32 %v1033, %v1377
        %v1379 = vpop.f32.mrb[0].mxu0
        %v1380 = vadd.f32 %v1037, %v1379
        %1381 = vmatprep.mubr.f32.mxu0 0.0
        %1382 = vmatmul.mubr.f32.gmra.mrb[0].mxu0 %v927
        %v1383 = vpop.f32.mrb[0].mxu0
        %v1384 = vadd.f32 %v1033, %v1383
        %v1385 = vpop.f32.mrb[0].mxu0
        %v1386 = vadd.f32 %v1037, %v1385
        %1387 = vmatprep.mubr.f32.mxu0 0.0
        %1388 = vmatmul.mubr.f32.gmra.mrb[0].mxu0 %v928
        %v1389 = vpop.f32.mrb[0].mxu0
        %v1390 = vadd.f32 %v1033, %v1389
        %v1391 = vpop.f32.mrb[0].mxu0
        %v1392 = vadd.f32 %v1037, %v1391
        %1393 = vmatprep.mubr.f32.mxu0 0.0
        %1394 = vmatmul.mubr.f32.gmra.mrb[0].mxu0 %v929
        %v1395 = vpop.f32.mrb[0].mxu0
        %v1396 = vadd.f32 %v1033, %v1395
        %v1397 = vpop.f32.mrb[0].mxu0
        %v1398 = vadd.f32 %v1037, %v1397
        %1399 = vmatprep.mubr.f32.mxu0 0.0
        %1400 = vmatmul.mubr.f32.gmra.mrb[0].mxu0 %v930
        %v1401 = vpop.f32.mrb[0].mxu0
        %v1402 = vadd.f32 %v1033, %v1401
        %v1403 = vpop.f32.mrb[0].mxu0
        %v1404 = vadd.f32 %v1037, %v1403
        %1405 = vmatprep.mubr.f32.mxu0 0.0
        %1406 = vmatmul.mubr.f32.gmra.mrb[0].mxu0 %v931
        %v1407 = vpop.f32.mrb[0].mxu0
        %v1408 = vadd.f32 %v1033, %v1407
        %v1409 = vpop.f32.mrb[0].mxu0
        %v1410 = vadd.f32 %v1037, %v1409
        %1411 = vmatprep.mubr.f32.mxu0 0.0
        %1412 = vmatmul.mubr.f32.gmra.mrb[0].mxu0 %v932
        %v1413 = vpop.f32.mrb[0].mxu0
        %v1414 = vadd.f32 %v1033, %v1413
        %v1415 = vpop.f32.mrb[0].mxu0
        %v1416 = vadd.f32 %v1037, %v1415
        %1417 = vmatprep.mubr.f32.mxu0 0.0
        %1418 = vmatmul.mubr.f32.gmra.mrb[0].mxu0 %v933
        %v1419 = vpop.f32.mrb[0].mxu0
        %v1420 = vadd.f32 %v1033, %v1419
        %v1421 = vpop.f32.mrb[0].mxu0
        %v1422 = vadd.f32 %v1037, %v1421
        %1423 = vmatprep.mubr.f32.mxu0 0.0
        %1424 = vmatmul.mubr.f32.gmra.mrb[0].mxu0 %v934
        %v1425 = vpop.f32.mrb[0].mxu0
        %v1426 = vadd.f32 %v1033, %v1425
        %v1427 = vpop.f32.mrb[0].mxu0
        %v1428 = vadd.f32 %v1037, %v1427
        %1429 = vmatprep.mubr.f32.mxu0 0.0
        %1430 = vmatmul.mubr.f32.gmra.mrb[0].mxu0 %v935
        %v1431 = vpop.f32.mrb[0].mxu0
        %v1432 = vadd.f32 %v1033, %v1431
        %v1433 = vpop.f32.mrb[0].mxu0
        %v1434 = vadd.f32 %v1037, %v1433
        %1435 = vmatprep.mubr.f32.mxu0 0.0
        %1436 = vmatmul.mubr.f32.gmra.mrb[0].mxu0 %v936
        %v1437 = vpop.f32.mrb[0].mxu0
        %v1438 = vadd.f32 %v1033, %v1437
        %v1439 = vpop.f32.mrb[0].mxu0
        %v1440 = vadd.f32 %v1037, %v1439
        %1441 = vmatprep.mubr.f32.mxu0 0.0
        %1442 = vmatmul.mubr.f32.gmra.mrb[0].mxu0 %v937
        %v1443 = vpop.f32.mrb[0].mxu0
        %v1444 = vadd.f32 %v1033, %v1443
        %v1445 = vpop.f32.mrb[0].mxu0
        %v1446 = vadd.f32 %v1037, %v1445
        %1447 = vmatprep.mubr.f32.mxu0 0.0
        %1448 = vmatmul.mubr.f32.gmra.mrb[0].mxu0 %v938
        %v1449 = vpop.f32.mrb[0].mxu0
        %v1450 = vadd.f32 %v1033, %v1449
        %v1451 = vpop.f32.mrb[0].mxu0
        %v1452 = vadd.f32 %v1037, %v1451
        %1453 = vmatprep.mubr.f32.mxu0 0.0
        %1454 = vmatmul.mubr.f32.gmra.mrb[0].mxu0 %v939
        %v1455 = vpop.f32.mrb[0].mxu0
        %v1456 = vadd.f32 %v1033, %v1455
        %v1457 = vpop.f32.mrb[0].mxu0
        %v1458 = vadd.f32 %v1037, %v1457
        %1459 = vmatprep.mubr.f32.mxu0 0.0
        %1460 = vmatmul.mubr.f32.gmra.mrb[0].mxu0 %v940
        %v1461 = vpop.f32.mrb[0].mxu0
        %v1462 = vadd.f32 %v1033, %v1461
        %v1463 = vpop.f32.mrb[0].mxu0
        %v1464 = vadd.f32 %v1037, %v1463
        %1465 = vmatprep.mubr.f32.mxu0 0.0
        %1466 = vmatmul.mubr.f32.gmra.mrb[0].mxu0 %v941
        %v1467 = vpop.f32.mrb[0].mxu0
        %v1468 = vadd.f32 %v1033, %v1467
        %v1469 = vpop.f32.mrb[0].mxu0
        %v1470 = vadd.f32 %v1037, %v1469
        %1471 = vmatprep.mubr.f32.mxu0 0.0
        %1472 = vmatmul.mubr.f32.gmra.mrb[0].mxu0 %v942
        %v1473 = vpop.f32.mrb[0].mxu0
        %v1474 = vadd.f32 %v1033, %v1473
        %v1475 = vpop.f32.mrb[0].mxu0
        %v1476 = vadd.f32 %v1037, %v1475
        %1477 = vmatprep.mubr.f32.mxu0 0.0
        %1478 = vmatmul.mubr.f32.gmra.mrb[0].mxu0 %v943
        %v1479 = vpop.f32.mrb[0].mxu0
        %v1480 = vadd.f32 %v1033, %v1479
        %v1481 = vpop.f32.mrb[0].mxu0
        %v1482 = vadd.f32 %v1037, %v1481
        %1483 = vmatprep.mubr.f32.mxu0 0.0
        %1484 = vmatmul.mubr.f32.gmra.mrb[0].mxu0 %v944
        %v1485 = vpop.f32.mrb[0].mxu0
        %v1486 = vadd.f32 %v1033, %v1485
        %v1487 = vpop.f32.mrb[0].mxu0
        %v1488 = vadd.f32 %v1037, %v1487
        %1489 = vmatprep.mubr.f32.mxu0 0.0
        %1490 = vmatmul.mubr.f32.gmra.mrb[0].mxu0 %v945
        %v1491 = vpop.f32.mrb[0].mxu0
        %v1492 = vadd.f32 %v1033, %v1491
        %v1493 = vpop.f32.mrb[0].mxu0
        %v1494 = vadd.f32 %v1037, %v1493
        %1495 = vmatprep.mubr.f32.mxu0 0.0
        %1496 = vmatmul.mubr.f32.gmra.mrb[0].mxu0 %v946
        %v1497 = vpop.f32.mrb[0].mxu0
        %v1498 = vadd.f32 %v1033, %v1497
        %v1499 = vpop.f32.mrb[0].mxu0
        %v1500 = vadd.f32 %v1037, %v1499
        %1501 = vmatprep.mubr.f32.mxu0 0.0
        %1502 = vmatmul.mubr.f32.gmra.mrb[0].mxu0 %v947
        %v1503 = vpop.f32.mrb[0].mxu0
        %v1504 = vadd.f32 %v1033, %v1503
        %v1505 = vpop.f32.mrb[0].mxu0
        %v1506 = vadd.f32 %v1037, %v1505
        %1507 = vmatprep.mubr.f32.mxu0 0.0
        %1508 = vmatmul.mubr.f32.gmra.mrb[0].mxu0 %v948
        %v1509 = vpop.f32.mrb[0].mxu0
        %v1510 = vadd.f32 %v1033, %v1509
        %v1511 = vpop.f32.mrb[0].mxu0
        %v1512 = vadd.f32 %v1037, %v1511
        %1513 = vmatprep.mubr.f32.mxu0 0.0
        %1514 = vmatmul.mubr.f32.gmra.mrb[0].mxu0 %v949
        %v1515 = vpop.f32.mrb[0].mxu0
        %v1516 = vadd.f32 %v1033, %v1515
        %v1517 = vpop.f32.mrb[0].mxu0
        %v1518 = vadd.f32 %v1037, %v1517
        %1519 = vmatprep.mubr.f32.mxu0 0.0
        %1520 = vmatmul.mubr.f32.gmra.mrb[0].mxu0 %v950
        %v1521 = vpop.f32.mrb[0].mxu0
        %v1522 = vadd.f32 %v1033, %v1521
        %v1523 = vpop.f32.mrb[0].mxu0
        %v1524 = vadd.f32 %v1037, %v1523
        %1525 = vmatprep.mubr.f32.mxu0 0.0
        %1526 = vmatmul.mubr.f32.gmra.mrb[0].mxu0 %v951
        %v1527 = vpop.f32.mrb[0].mxu0
        %v1528 = vadd.f32 %v1033, %v1527
        %v1529 = vpop.f32.mrb[0].mxu0
        %v1530 = vadd.f32 %v1037, %v1529
        %1531 = vmatprep.mubr.f32.mxu0 0.0
        %1532 = vmatmul.mubr.f32.gmra.mrb[0].mxu0 %v952
        %v1533 = vpop.f32.mrb[0].mxu0
        %v1534 = vadd.f32 %v1033, %v1533
        %v1535 = vpop.f32.mrb[0].mxu0
        %v1536 = vadd.f32 %v1037, %v1535
        %1537 = vmatprep.mubr.f32.mxu0 0.0
        %1538 = vmatmul.mubr.f32.gmra.mrb[0].mxu0 %v953
        %v1539 = vpop.f32.mrb[0].mxu0
        %v1540 = vadd.f32 %v1033, %v1539
        %v1541 = vpop.f32.mrb[0].mxu0
        %v1542 = vadd.f32 %v1037, %v1541
        %1543 = vmatprep.mubr.f32.mxu0 0.0
        %1544 = vmatmul.mubr.f32.gmra.mrb[0].mxu0 %v954
        %v1545 = vpop.f32.mrb[0].mxu0
        %v1546 = vadd.f32 %v1033, %v1545
        %v1547 = vpop.f32.mrb[0].mxu0
        %v1548 = vadd.f32 %v1037, %v1547
        %1549 = vmatprep.mubr.f32.mxu0 0.0
        %1550 = vmatmul.mubr.f32.gmra.mrb[0].mxu0 %v955
        %v1551 = vpop.f32.mrb[0].mxu0
        %v1552 = vadd.f32 %v1033, %v1551
        %v1553 = vpop.f32.mrb[0].mxu0
        %v1554 = vadd.f32 %v1037, %v1553
        %1555 = vdwg.mxu0
        %v1556 = vmax.f32 %v1109, 0.0
        %v1557 = vmax.f32 %v1111, 0.0
        %v1558 = vmax.f32 %v1366, 0.0
        %v1559 = vmax.f32 %v1368, 0.0
        %v1560 = vmax.f32 %v1115, 0.0
        %v1561 = vmax.f32 %v1117, 0.0
        %v1562 = vmax.f32 %v1372, 0.0
        %v1563 = vmax.f32 %v1374, 0.0
        %v1564 = vmax.f32 %v1121, 0.0
        %v1565 = vmax.f32 %v1123, 0.0
        %v1566 = vmax.f32 %v1378, 0.0
        %v1567 = vmax.f32 %v1380, 0.0
        %v1568 = vmax.f32 %v1127, 0.0
        %v1569 = vmax.f32 %v1129, 0.0
        %v1570 = vmax.f32 %v1384, 0.0
        %v1571 = vmax.f32 %v1386, 0.0
        %v1572 = vmax.f32 %v1133, 0.0
        %v1573 = vmax.f32 %v1135, 0.0
        %v1574 = vmax.f32 %v1390, 0.0
        %v1575 = vmax.f32 %v1392, 0.0
        %v1576 = vmax.f32 %v1139, 0.0
        %v1577 = vmax.f32 %v1141, 0.0
        %v1578 = vmax.f32 %v1396, 0.0
        %v1579 = vmax.f32 %v1398, 0.0
        %v1580 = vmax.f32 %v1145, 0.0
        %v1581 = vmax.f32 %v1147, 0.0
        %v1582 = vmax.f32 %v1402, 0.0
        %v1583 = vmax.f32 %v1404, 0.0
        %v1584 = vmax.f32 %v1151, 0.0
        %v1585 = vmax.f32 %v1153, 0.0
        %v1586 = vmax.f32 %v1408, 0.0
        %v1587 = vmax.f32 %v1410, 0.0
        %v1588 = vmax.f32 %v1157, 0.0
        %v1589 = vmax.f32 %v1159, 0.0
        %v1590 = vmax.f32 %v1414, 0.0
        %v1591 = vmax.f32 %v1416, 0.0
        %v1592 = vmax.f32 %v1163, 0.0
        %v1593 = vmax.f32 %v1165, 0.0
        %v1594 = vmax.f32 %v1420, 0.0
        %v1595 = vmax.f32 %v1422, 0.0
        %v1596 = vmax.f32 %v1169, 0.0
        %v1597 = vmax.f32 %v1171, 0.0
        %v1598 = vmax.f32 %v1426, 0.0
        %v1599 = vmax.f32 %v1428, 0.0
        %v1600 = vmax.f32 %v1175, 0.0
        %v1601 = vmax.f32 %v1177, 0.0
        %v1602 = vmax.f32 %v1432, 0.0
        %v1603 = vmax.f32 %v1434, 0.0
        %v1604 = vmax.f32 %v1181, 0.0
        %v1605 = vmax.f32 %v1183, 0.0
        %v1606 = vmax.f32 %v1438, 0.0
        %v1607 = vmax.f32 %v1440, 0.0
        %v1608 = vmax.f32 %v1187, 0.0
        %v1609 = vmax.f32 %v1189, 0.0
        %v1610 = vmax.f32 %v1444, 0.0
        %v1611 = vmax.f32 %v1446, 0.0
        %v1612 = vmax.f32 %v1193, 0.0
        %v1613 = vmax.f32 %v1195, 0.0
        %v1614 = vmax.f32 %v1450, 0.0
        %v1615 = vmax.f32 %v1452, 0.0
        %v1616 = vmax.f32 %v1199, 0.0
        %v1617 = vmax.f32 %v1201, 0.0
        %v1618 = vmax.f32 %v1456, 0.0
        %v1619 = vmax.f32 %v1458, 0.0
        %v1620 = vmax.f32 %v1205, 0.0
        %v1621 = vmax.f32 %v1207, 0.0
        %v1622 = vmax.f32 %v1462, 0.0
        %v1623 = vmax.f32 %v1464, 0.0
        %v1624 = vmax.f32 %v1211, 0.0
        %v1625 = vmax.f32 %v1213, 0.0
        %v1626 = vmax.f32 %v1468, 0.0
        %v1627 = vmax.f32 %v1470, 0.0
        %v1628 = vmax.f32 %v1217, 0.0
        %v1629 = vmax.f32 %v1219, 0.0
        %v1630 = vmax.f32 %v1474, 0.0
        %v1631 = vmax.f32 %v1476, 0.0
        %v1632 = vmax.f32 %v1223, 0.0
        %v1633 = vmax.f32 %v1225, 0.0
        %v1634 = vmax.f32 %v1480, 0.0
        %v1635 = vmax.f32 %v1482, 0.0
        %v1636 = vmax.f32 %v1229, 0.0
        %v1637 = vmax.f32 %v1231, 0.0
        %v1638 = vmax.f32 %v1486, 0.0
        %v1639 = vmax.f32 %v1488, 0.0
        %v1640 = vmax.f32 %v1235, 0.0
        %v1641 = vmax.f32 %v1237, 0.0
        %v1642 = vmax.f32 %v1492, 0.0
        %v1643 = vmax.f32 %v1494, 0.0
        %v1644 = vmax.f32 %v1241, 0.0
        %v1645 = vmax.f32 %v1243, 0.0
        %v1646 = vmax.f32 %v1498, 0.0
        %v1647 = vmax.f32 %v1500, 0.0
        %v1648 = vmax.f32 %v1247, 0.0
        %v1649 = vmax.f32 %v1249, 0.0
        %v1650 = vmax.f32 %v1504, 0.0
        %v1651 = vmax.f32 %v1506, 0.0
        %v1652 = vmax.f32 %v1253, 0.0
        %v1653 = vmax.f32 %v1255, 0.0
        %v1654 = vmax.f32 %v1510, 0.0
        %v1655 = vmax.f32 %v1512, 0.0
        %v1656 = vmax.f32 %v1259, 0.0
        %v1657 = vmax.f32 %v1261, 0.0
        %v1658 = vmax.f32 %v1516, 0.0
        %v1659 = vmax.f32 %v1518, 0.0
        %v1660 = vmax.f32 %v1265, 0.0
        %v1661 = vmax.f32 %v1267, 0.0
        %v1662 = vmax.f32 %v1522, 0.0
        %v1663 = vmax.f32 %v1524, 0.0
        %v1664 = vmax.f32 %v1271, 0.0
        %v1665 = vmax.f32 %v1273, 0.0
        %v1666 = vmax.f32 %v1528, 0.0
        %v1667 = vmax.f32 %v1530, 0.0
        %v1668 = vmax.f32 %v1277, 0.0
        %v1669 = vmax.f32 %v1279, 0.0
        %v1670 = vmax.f32 %v1534, 0.0
        %v1671 = vmax.f32 %v1536, 0.0
        %v1672 = vmax.f32 %v1283, 0.0
        %v1673 = vmax.f32 %v1285, 0.0
        %v1674 = vmax.f32 %v1540, 0.0
        %v1675 = vmax.f32 %v1542, 0.0
        %v1676 = vmax.f32 %v1289, 0.0
        %v1677 = vmax.f32 %v1291, 0.0
        %v1678 = vmax.f32 %v1546, 0.0
        %v1679 = vmax.f32 %v1548, 0.0
        %v1680 = vmax.f32 %v1295, 0.0
        %v1681 = vmax.f32 %v1297, 0.0
        %v1682 = vmax.f32 %v1552, 0.0
        %v1683 = vmax.f32 %v1554, 0.0
        %1684 = vst [vmem:[%s272] sm:$0xff] %v1556
        %1685 = vst [vmem:[%s272 + $0x8] sm:$0xff] %v1557
        %1686 = vst [vmem:[%s272 + $0x10] sm:$0xff] %v1558
        %1687 = vst [vmem:[%s272 + $0x18] sm:$0xff] %v1559
        %1688 = vst [vmem:[%s272 + $0x20] sm:$0xff] %v1560
        %1689 = vst [vmem:[%s272 + $0x28] sm:$0xff] %v1561
        %1690 = vst [vmem:[%s272 + $0x30] sm:$0xff] %v1562
        %1691 = vst [vmem:[%s272 + $0x38] sm:$0xff] %v1563
        %1692 = vst [vmem:[%s272 + $0x40] sm:$0xff] %v1564
        %1693 = vst [vmem:[%s272 + $0x48] sm:$0xff] %v1565
        %1694 = vst [vmem:[%s272 + $0x50] sm:$0xff] %v1566
        %1695 = vst [vmem:[%s272 + $0x58] sm:$0xff] %v1567
        %1696 = vst [vmem:[%s272 + $0x60] sm:$0xff] %v1568
        %1697 = vst [vmem:[%s272 + $0x68] sm:$0xff] %v1569
        %1698 = vst [vmem:[%s272 + $0x70] sm:$0xff] %v1570
        %1699 = vst [vmem:[%s272 + $0x78] sm:$0xff] %v1571
        %1700 = vst [vmem:[%s272 + $0x80] sm:$0xff] %v1572
        %1701 = vst [vmem:[%s272 + $0x88] sm:$0xff] %v1573
        %1702 = vst [vmem:[%s272 + $0x90] sm:$0xff] %v1574
        %1703 = vst [vmem:[%s272 + $0x98] sm:$0xff] %v1575
        %1704 = vst [vmem:[%s272 + $0xa0] sm:$0xff] %v1576
        %1705 = vst [vmem:[%s272 + $0xa8] sm:$0xff] %v1577
        %1706 = vst [vmem:[%s272 + $0xb0] sm:$0xff] %v1578
        %1707 = vst [vmem:[%s272 + $0xb8] sm:$0xff] %v1579
        %1708 = vst [vmem:[%s272 + $0xc0] sm:$0xff] %v1580
        %1709 = vst [vmem:[%s272 + $0xc8] sm:$0xff] %v1581
        %1710 = vst [vmem:[%s272 + $0xd0] sm:$0xff] %v1582
        %1711 = vst [vmem:[%s272 + $0xd8] sm:$0xff] %v1583
        %1712 = vst [vmem:[%s272 + $0xe0] sm:$0xff] %v1584
        %1713 = vst [vmem:[%s272 + $0xe8] sm:$0xff] %v1585
        %1714 = vst [vmem:[%s272 + $0xf0] sm:$0xff] %v1586
        %1715 = vst [vmem:[%s272 + $0xf8] sm:$0xff] %v1587
        %1716 = vst [vmem:[%s272 + $0x100] sm:$0xff] %v1588
        %1717 = vst [vmem:[%s272 + $0x108] sm:$0xff] %v1589
        %1718 = vst [vmem:[%s272 + $0x110] sm:$0xff] %v1590
        %1719 = vst [vmem:[%s272 + $0x118] sm:$0xff] %v1591
        %1720 = vst [vmem:[%s272 + $0x120] sm:$0xff] %v1592
        %1721 = vst [vmem:[%s272 + $0x128] sm:$0xff] %v1593
        %1722 = vst [vmem:[%s272 + $0x130] sm:$0xff] %v1594
        %1723 = vst [vmem:[%s272 + $0x138] sm:$0xff] %v1595
        %1724 = vst [vmem:[%s272 + $0x140] sm:$0xff] %v1596
        %1725 = vst [vmem:[%s272 + $0x148] sm:$0xff] %v1597
        %1726 = vst [vmem:[%s272 + $0x150] sm:$0xff] %v1598
        %1727 = vst [vmem:[%s272 + $0x158] sm:$0xff] %v1599
        %1728 = vst [vmem:[%s272 + $0x160] sm:$0xff] %v1600
        %1729 = vst [vmem:[%s272 + $0x168] sm:$0xff] %v1601
        %1730 = vst [vmem:[%s272 + $0x170] sm:$0xff] %v1602
        %1731 = vst [vmem:[%s272 + $0x178] sm:$0xff] %v1603
        %1732 = vst [vmem:[%s272 + $0x180] sm:$0xff] %v1604
        %1733 = vst [vmem:[%s272 + $0x188] sm:$0xff] %v1605
        %1734 = vst [vmem:[%s272 + $0x190] sm:$0xff] %v1606
        %1735 = vst [vmem:[%s272 + $0x198] sm:$0xff] %v1607
        %1736 = vst [vmem:[%s272 + $0x1a0] sm:$0xff] %v1608
        %1737 = vst [vmem:[%s272 + $0x1a8] sm:$0xff] %v1609
        %1738 = vst [vmem:[%s272 + $0x1b0] sm:$0xff] %v1610
        %1739 = vst [vmem:[%s272 + $0x1b8] sm:$0xff] %v1611
        %1740 = vst [vmem:[%s272 + $0x1c0] sm:$0xff] %v1612
        %1741 = vst [vmem:[%s272 + $0x1c8] sm:$0xff] %v1613
        %1742 = vst [vmem:[%s272 + $0x1d0] sm:$0xff] %v1614
        %1743 = vst [vmem:[%s272 + $0x1d8] sm:$0xff] %v1615
        %1744 = vst [vmem:[%s272 + $0x1e0] sm:$0xff] %v1616
        %1745 = vst [vmem:[%s272 + $0x1e8] sm:$0xff] %v1617
        %1746 = vst [vmem:[%s272 + $0x1f0] sm:$0xff] %v1618
        %1747 = vst [vmem:[%s272 + $0x1f8] sm:$0xff] %v1619
        %1748 = vst [vmem:[%s272 + $0x200] sm:$0xff] %v1620
        %1749 = vst [vmem:[%s272 + $0x208] sm:$0xff] %v1621
        %1750 = vst [vmem:[%s272 + $0x210] sm:$0xff] %v1622
        %1751 = vst [vmem:[%s272 + $0x218] sm:$0xff] %v1623
        %1752 = vst [vmem:[%s272 + $0x220] sm:$0xff] %v1624
        %1753 = vst [vmem:[%s272 + $0x228] sm:$0xff] %v1625
        %1754 = vst [vmem:[%s272 + $0x230] sm:$0xff] %v1626
        %1755 = vst [vmem:[%s272 + $0x238] sm:$0xff] %v1627
        %1756 = vst [vmem:[%s272 + $0x240] sm:$0xff] %v1628
        %1757 = vst [vmem:[%s272 + $0x248] sm:$0xff] %v1629
        %1758 = vst [vmem:[%s272 + $0x250] sm:$0xff] %v1630
        %1759 = vst [vmem:[%s272 + $0x258] sm:$0xff] %v1631
        %1760 = vst [vmem:[%s272 + $0x260] sm:$0xff] %v1632
        %1761 = vst [vmem:[%s272 + $0x268] sm:$0xff] %v1633
        %1762 = vst [vmem:[%s272 + $0x270] sm:$0xff] %v1634
        %1763 = vst [vmem:[%s272 + $0x278] sm:$0xff] %v1635
        %1764 = vst [vmem:[%s272 + $0x280] sm:$0xff] %v1636
        %1765 = vst [vmem:[%s272 + $0x288] sm:$0xff] %v1637
        %1766 = vst [vmem:[%s272 + $0x290] sm:$0xff] %v1638
        %1767 = vst [vmem:[%s272 + $0x298] sm:$0xff] %v1639
        %1768 = vst [vmem:[%s272 + $0x2a0] sm:$0xff] %v1640
        %1769 = vst [vmem:[%s272 + $0x2a8] sm:$0xff] %v1641
        %1770 = vst [vmem:[%s272 + $0x2b0] sm:$0xff] %v1642
        %1771 = vst [vmem:[%s272 + $0x2b8] sm:$0xff] %v1643
        %1772 = vst [vmem:[%s272 + $0x2c0] sm:$0xff] %v1644
        %1773 = vst [vmem:[%s272 + $0x2c8] sm:$0xff] %v1645
        %1774 = vst [vmem:[%s272 + $0x2d0] sm:$0xff] %v1646
        %1775 = vst [vmem:[%s272 + $0x2d8] sm:$0xff] %v1647
        %1776 = vst [vmem:[%s272 + $0x2e0] sm:$0xff] %v1648
        %1777 = vst [vmem:[%s272 + $0x2e8] sm:$0xff] %v1649
        %1778 = vst [vmem:[%s272 + $0x2f0] sm:$0xff] %v1650
        %1779 = vst [vmem:[%s272 + $0x2f8] sm:$0xff] %v1651
        %1780 = vst [vmem:[%s272 + $0x300] sm:$0xff] %v1652
        %1781 = vst [vmem:[%s272 + $0x308] sm:$0xff] %v1653
        %1782 = vst [vmem:[%s272 + $0x310] sm:$0xff] %v1654
        %1783 = vst [vmem:[%s272 + $0x318] sm:$0xff] %v1655
        %1784 = vst [vmem:[%s272 + $0x320] sm:$0xff] %v1656
        %1785 = vst [vmem:[%s272 + $0x328] sm:$0xff] %v1657
        %1786 = vst [vmem:[%s272 + $0x330] sm:$0xff] %v1658
        %1787 = vst [vmem:[%s272 + $0x338] sm:$0xff] %v1659
        %1788 = vst [vmem:[%s272 + $0x340] sm:$0xff] %v1660
        %1789 = vst [vmem:[%s272 + $0x348] sm:$0xff] %v1661
        %1790 = vst [vmem:[%s272 + $0x350] sm:$0xff] %v1662
        %1791 = vst [vmem:[%s272 + $0x358] sm:$0xff] %v1663
        %1792 = vst [vmem:[%s272 + $0x360] sm:$0xff] %v1664
        %1793 = vst [vmem:[%s272 + $0x368] sm:$0xff] %v1665
        %1794 = vst [vmem:[%s272 + $0x370] sm:$0xff] %v1666
        %1795 = vst [vmem:[%s272 + $0x378] sm:$0xff] %v1667
        %1796 = vst [vmem:[%s272 + $0x380] sm:$0xff] %v1668
        %1797 = vst [vmem:[%s272 + $0x388] sm:$0xff] %v1669
        %1798 = vst [vmem:[%s272 + $0x390] sm:$0xff] %v1670
        %1799 = vst [vmem:[%s272 + $0x398] sm:$0xff] %v1671
        %1800 = vst [vmem:[%s272 + $0x3a0] sm:$0xff] %v1672
        %1801 = vst [vmem:[%s272 + $0x3a8] sm:$0xff] %v1673
        %1802 = vst [vmem:[%s272 + $0x3b0] sm:$0xff] %v1674
        %1803 = vst [vmem:[%s272 + $0x3b8] sm:$0xff] %v1675
        %1804 = vst [vmem:[%s272 + $0x3c0] sm:$0xff] %v1676
        %1805 = vst [vmem:[%s272 + $0x3c8] sm:$0xff] %v1677
        %1806 = vst [vmem:[%s272 + $0x3d0] sm:$0xff] %v1678
        %1807 = vst [vmem:[%s272 + $0x3d8] sm:$0xff] %v1679
        %1808 = vst [vmem:[%s272 + $0x3e0] sm:$0xff] %v1680
        %1809 = vst [vmem:[%s272 + $0x3e8] sm:$0xff] %v1681
        %1810 = vst [vmem:[%s272 + $0x3f0] sm:$0xff] %v1682
        %1811 = vst [vmem:[%s272 + $0x3f8] sm:$0xff] %v1683
        %s1812 = sand.u32 %s141, 1
        %s1813 = scalar_lea.sflag [#allocation4], %s1812
        %s1814 = sand.u32 %s141, 1
        %s1815 = smul.addr %s1814, 1024
        %s1816 = scalar_lea.vmem [#allocation8], %s1815
        // Predicated region
        $region53: #{tpu_custom_call.1} parent=39 // pred_check
          %p1817 = pneg %p151
        $region54: #{tpu_custom_call.1} parent=39 // pred_check_branch
          %1819 = sbr.rel (%p1817) target = $region56
        $region55: #{tpu_custom_call.1} parent=39 // pred_region
          %s1820 = smul.u32 32, %s23
          %s1822 = ssub.s32 16384, 16384
          %1823 = vsyncadd %s1813, %s1822
          %s1824 = smul.addr %s1820, 4
          %s1825 = smul.addr %s1824, 128
          %s1826 = scalar_lea.hbm %s5, %s1825
          %s1827 = sshll.u32 %s1816, 4
          %s1828 = int_to_ptr.vmem [resolvable:$true] %s1827
          %1833 = dma.vmem_to_hbm [thread:$0]  %s1828, 16384, %s1826, %s1813, 512, 512, 32
        $region56: #{tpu_custom_call.1} parent=39 // pred_fallthru
          _
      $region40: #{tpu_custom_call.1} parent=5 // pred_fallthru
        _
      %p1834 = scmp.le.s32.totalorder 2, %s18
      // Predicated region
      $region57: #{tpu_custom_call.1} parent=5 // pred_check
        %p1835 = pneg %p1834
      $region58: #{tpu_custom_call.1} parent=5 // pred_check_branch
        %1837 = sbr.rel (%p1835) target = $region60
      $region59: #{tpu_custom_call.1} parent=5 // pred_region
        %s1838 = ssub.s32 %s18, 2
        // Predicated region
        $region61: #{tpu_custom_call.1} parent=59 // pred_check
          %p1839 = pneg %p157
        $region62: #{tpu_custom_call.1} parent=59 // pred_check_branch
          %1841 = sbr.rel (%p1839) target = $region64
        $region63: #{tpu_custom_call.1} parent=59 // pred_region
          %s1842 = sand.u32 %s142, 1
          %s1843 = scalar_lea.sflag [#allocation4], %s1842
          %s1844 = sand.u32 %s142, 1
          %s1845 = smul.addr %s1844, 1024
          %s1846 = scalar_lea.vmem [#allocation8], %s1845
          %1847 = dma.done %s1843, 16384
        $region64: #{tpu_custom_call.1} parent=59 // pred_fallthru
          _
      $region60: #{tpu_custom_call.1} parent=5 // pred_fallthru
        _
    $region6: #{tpu_custom_call.1} parent=1 // loop_footer
      %s22 = sadd.s32 1, %s18
    $region7: #{tpu_custom_call.1} parent=1 // loop_footer_branch
      %17 = sbr.rel target = $region3
    $region8: #{tpu_custom_call.1} parent=1 // loop_exit
      _
    %1848 = vsyncpa [#allocation3], 1
    %s1849 = scalar_lea.sflag [#allocation3], 1
    %1850 = vsyncpa %s1849, 1
    %1851 = vsyncpa [#allocation6], 1
    %1852 = vsyncpa [#allocation4], 1
    %s1853 = scalar_lea.sflag [#allocation4], 1
    %1854 = vsyncpa %s1853, 1

</llo_original>
